<compile_context>
chip_gen: v7x
topology: tpu7x:2x2x1
jax: 0.10.0
libtpu: 0.0.40
codegen_flags: <defaults>
</compile_context>

<pallas_src>
import jax
import jax.numpy as jnp
import numpy as np
from jax import lax
from jax.experimental import pallas as pl
from jax.experimental.pallas import tpu as pltpu

# ---- small, module-consistent shapes --------------------------------------
N, H, W, C = 2, 8, 8, 32       # batch, spatial, channels (inplanes == planes)
RED = 16                       # SELayer reduction
CR = C // RED                  # SE hidden width (= 2)
WC = W * C                     # lane-dense row width (= 256)
EPS = 1e-5                     # BatchNorm eps


def se_basic_block_kernel(x_ref, wb1_ref, wb2_ref, bias_ref, se1_ref, se2_ref,
                          o_ref, pad_scr):
    """Whole batch, single invocation, lane-dense activations.

    x_ref   : (N, H, W*C)   f32   input, lanes = (x, c)
    wb*_ref : (3, W*C, W*C) bf16  per-dy banded conv weights, BN scale folded
    bias_ref: (2, W*C)      f32   rows = lane-tiled [bn1_bias, bn2_bias]
    se*_ref : (CR, C)       f32   SE fc1 weight / fc2 weight (transposed)
    pad_scr : (N, H+2, W*C) bf16  conv input with 1-row top/bottom zero halo
    """
    # Zero only the vertical halo rows, once; they persist across both convs.
    # (Horizontal padding is encoded in the banded weights, so no side halo.)
    zrow = jnp.zeros((N, 1, WC), jnp.bfloat16)
    pad_scr[:, 0:1, :] = zrow
    pad_scr[:, H + 1:H + 2, :] = zrow

    def conv3x3(xin, wb_ref):
        """xin (N, H, W*C) f32 -> (N, H, W*C) f32 (BN scale pre-folded)."""
        xin_bf = xin.astype(jnp.bfloat16)            # cast once per conv
        for n in range(N):                           # aligned 256-lane stores
            pad_scr[n:n + 1, 1:1 + H, :] = xin_bf[n:n + 1]
        outs = []
        for n in range(N):
            rows0 = pad_scr[n:n + 1, 0:H, :].reshape(H, WC)
            rows1 = pad_scr[n:n + 1, 1:1 + H, :].reshape(H, WC)
            rows2 = pad_scr[n:n + 1, 2:2 + H, :].reshape(H, WC)
            acc = jnp.dot(rows0, wb_ref[0], preferred_element_type=jnp.float32)
            acc = acc + jnp.dot(rows1, wb_ref[1],
                                preferred_element_type=jnp.float32)
            acc = acc + jnp.dot(rows2, wb_ref[2],
                                preferred_element_type=jnp.float32)
            outs.append(acc)                         # (H, W*C) f32, lane-dense
        return jnp.stack(outs, axis=0)               # (N, H, W*C)

    x = x_ref[...]                                   # (N, H, W*C) f32
    bias = bias_ref[...]                             # (2, W*C) f32
    b1 = bias[0:1, :].reshape(1, 1, WC)
    b2 = bias[1:2, :].reshape(1, 1, WC)

    # conv1 (bn1 scale folded) -> bias -> relu
    h1 = jnp.maximum(conv3x3(x, wb1_ref) + b1, 0.0)

    # conv2 (bn2 scale folded) -> bias
    out2 = conv3x3(h1, wb2_ref) + b2                 # (N, H, W*C) f32

    # ---- SE: global avg pool -> fc1 -> relu -> fc2 -> sigmoid (VPU/XLU only)
    rowsum = jnp.sum(out2, axis=1)                   # (N, W*C): sum over H
    p = rowsum                                       # tree-fold the W chunks
    width = WC
    while width > C:
        half = width // 2
        p = p[:, 0:half] + p[:, half:width]
        width = half
    pooled = p * (1.0 / (H * W))                     # (N, C)

    se1 = se1_ref[...]                               # (CR, C)
    se2 = se2_ref[...]                               # (CR, C)
    s_pre = jnp.zeros((N, C), jnp.float32)
    for j in range(CR):                              # CR == 2, unrolled
        hj = jnp.sum(pooled * se1[j:j + 1, :], axis=-1, keepdims=True)  # (N,1)
        hj = jnp.maximum(hj, 0.0)
        s_pre = s_pre + hj * se2[j:j + 1, :]
    s = jax.nn.sigmoid(s_pre)                        # (N, C)
    s_tiled = jnp.concatenate([s] * W, axis=-1)      # (N, W*C), lanes = (x, c)

    # channel scale + residual (stride=1, downsample=None) + final relu
    o_ref[...] = jnp.maximum(out2 * s_tiled[:, None, :] + x, 0.0)


def se_basic_block(x_nhwc, wb1, wb2, biases, se1, se2):
    x_ld = x_nhwc.reshape(N, H, WC)   # free metadata reshape (contiguous NHWC)
    full = lambda shp: pl.BlockSpec(shp, lambda i: (0,) * len(shp))
    out = pl.pallas_call(
        se_basic_block_kernel,
        out_shape=jax.ShapeDtypeStruct((N, H, WC), jnp.float32),
        grid=(1,),
        in_specs=[
            full((N, H, WC)),        # x (f32, lane-dense)
            full((3, WC, WC)),       # conv1 banded weights (bf16)
            full((3, WC, WC)),       # conv2 banded weights (bf16)
            full((2, WC)),           # lane-tiled BN biases (f32)
            full((CR, C)),           # SE fc1 weight (f32)
            full((CR, C)),           # SE fc2 weight, transposed (f32)
        ],
        out_specs=full((N, H, WC)),
        scratch_shapes=[pltpu.VMEM((N, H + 2, WC), jnp.bfloat16)],
        compiler_params=pltpu.CompilerParams(
            dimension_semantics=("arbitrary",)),
    )(x_ld, wb1, wb2, biases, se1, se2)
    return out.reshape(N, H, W, C)


# ---- host-side weight prep -------------------------------------------------
def build_banded_weight(w_hwio, bn_scale):
    """HWIO (3,3,C,C) conv weight * per-cout BN scale  ->  (3, W*C, W*C) bf16.

    WB[dy][(xin*C + ci), (xout*C + co)] = w[dy, xin - xout + 1, ci, co]
    for |xin - xout| <= 1, else 0.  A lane-dense padded activation row (y+dy)
    times WB[dy], summed over dy, is the SAME-padded conv3x3 output row y.
    """
    wf = np.asarray((w_hwio * bn_scale[None, None, None, :])
                    .astype(jnp.bfloat16).astype(jnp.float32))
    wb = np.zeros((3, WC, WC), np.float32)
    for dy in range(3):
        for xout in range(W):
            for kx in range(3):
                xin = xout + kx - 1
                if 0 <= xin < W:
                    wb[dy, xin * C:(xin + 1) * C,
                       xout * C:(xout + 1) * C] = wf[dy, kx]
    return jnp.asarray(wb).astype(jnp.bfloat16)   # exact: values already bf16


# ---- pure-JAX reference (same math: bf16 conv operands w/ folded BN scale,
# ---- f32 accumulation; BN is eval-mode folded scale/bias) -------------------
def reference(x, w1_hwio, w2_hwio, bn1s, bn1b, bn2s, bn2b, se1, se2):
    def conv_bn(a, w, scale, bias):
        wf = (w * scale[None, None, None, :]).astype(jnp.bfloat16)
        y = lax.conv_general_dilated(
            a.astype(jnp.bfloat16), wf, (1, 1), "SAME",
            dimension_numbers=("NHWC", "HWIO", "NHWC"),
            preferred_element_type=jnp.float32)
        return y + bias

    out = jnp.maximum(conv_bn(x, w1_hwio, bn1s, bn1b), 0.0)
    out = conv_bn(out, w2_hwio, bn2s, bn2b)
    pooled = jnp.mean(out, axis=(1, 2))                                 # (N,C)
    h = jnp.maximum(jnp.dot(pooled, se1.T,
                            precision=lax.Precision.HIGHEST), 0.0)      # (N,CR)
    s = jax.nn.sigmoid(jnp.dot(h, se2,
                               precision=lax.Precision.HIGHEST))        # (N,C)
    out = out * s[:, None, None, :]
    return jnp.maximum(out + x, 0.0)


if __name__ == "__main__":
    key = jax.random.PRNGKey(0)
    ks = jax.random.split(key, 7)

    x = jax.random.normal(ks[0], (N, H, W, C), jnp.float32)

    # conv weights (HWIO), deterministic
    w1 = jax.random.normal(ks[1], (3, 3, C, C), jnp.float32) * 0.1
    w2 = jax.random.normal(ks[2], (3, 3, C, C), jnp.float32) * 0.1

    # BatchNorm params (eval-mode), folded into per-channel scale/bias
    def bn_fold(k):
        kg, kb, km, kv = jax.random.split(k, 4)
        gamma = 1.0 + 0.1 * jax.random.normal(kg, (C,), jnp.float32)
        beta = 0.1 * jax.random.normal(kb, (C,), jnp.float32)
        mean = 0.1 * jax.random.normal(km, (C,), jnp.float32)
        var = jnp.abs(jax.random.normal(kv, (C,), jnp.float32)) + 0.5
        scale = gamma / jnp.sqrt(var + EPS)
        bias = beta - mean * scale
        return scale, bias

    bn1s, bn1b = bn_fold(ks[3])
    bn2s, bn2b = bn_fold(ks[4])

    # SE fc weights: fc1 weight is (C//RED, C) like torch Linear; fc2 weight is
    # stored transposed as (C//RED, C) so the kernel uses only lane-shaped rows.
    se1 = jax.random.normal(ks[5], (CR, C), jnp.float32) * 0.2
    se2 = jax.random.normal(ks[6], (CR, C), jnp.float32) * 0.2

    # host-side prep: banded conv weights (BN scale folded) + lane-tiled biases
    wb1 = build_banded_weight(w1, bn1s)
    wb2 = build_banded_weight(w2, bn2s)
    biases = jnp.stack([jnp.tile(bn1b, W), jnp.tile(bn2b, W)], axis=0)  # (2,WC)

    out = se_basic_block(x, wb1, wb2, biases, se1, se2)
    out = jax.block_until_ready(out)

    ref = reference(x, w1, w2, bn1s, bn1b, bn2s, bn2b, se1, se2)
    np.testing.assert_allclose(np.asarray(out), np.asarray(ref),
                               rtol=2e-3, atol=2e-3)
    print("KERNEL_OK")
</pallas_src>

<mosaic_0001>
module attributes {stable_mosaic.version = 11 : i64} {
  func.func @se_basic_block_kernel(%arg0: i32, %arg1: memref<2x8x256xf32, #tpu.memory_space<vmem>>, %arg2: memref<3x256x256xbf16, #tpu.memory_space<vmem>>, %arg3: memref<3x256x256xbf16, #tpu.memory_space<vmem>>, %arg4: memref<2x256xf32, #tpu.memory_space<vmem>>, %arg5: memref<2x32xf32, #tpu.memory_space<vmem>>, %arg6: memref<2x32xf32, #tpu.memory_space<vmem>>, %arg7: memref<2x8x256xf32, #tpu.memory_space<vmem>>, %arg8: memref<2x10x256xbf16, #tpu.memory_space<vmem>>) attributes {dimension_semantics = [#tpu.dimension_semantics<arbitrary>], iteration_bounds = array<i64: 1>, scalar_prefetch = 0 : i64, scratch_operands = 1 : i64, tpu.core_type = #tpu.core_type<tc>, window_params = [{pipeline_mode = #tpu.pipeline_mode<synchronous>, transform_indices = @transform_0, window_bounds = array<i64: 2, 8, 256>}, {pipeline_mode = #tpu.pipeline_mode<synchronous>, transform_indices = @transform_1, window_bounds = array<i64: 3, 256, 256>}, {pipeline_mode = #tpu.pipeline_mode<synchronous>, transform_indices = @transform_2, window_bounds = array<i64: 3, 256, 256>}, {pipeline_mode = #tpu.pipeline_mode<synchronous>, transform_indices = @transform_3, window_bounds = array<i64: 2, 256>}, {pipeline_mode = #tpu.pipeline_mode<synchronous>, transform_indices = @transform_4, window_bounds = array<i64: 2, 32>}, {pipeline_mode = #tpu.pipeline_mode<synchronous>, transform_indices = @transform_5, window_bounds = array<i64: 2, 32>}, {pipeline_mode = #tpu.pipeline_mode<synchronous>, transform_indices = @transform_6, window_bounds = array<i64: 2, 8, 256>}]} {
    %cst = arith.constant 0.000000e+00 : bf16
    %0 = vector.broadcast %cst : bf16 to vector<2x1x256xbf16>
    %c0 = arith.constant 0 : index
    %c0_0 = arith.constant 0 : index
    %c0_1 = arith.constant 0 : index
    %1 = vector.load %arg8[%c0, %c0_0, %c0_1] : memref<2x10x256xbf16, #tpu.memory_space<vmem>>, vector<2x1x256xbf16>
    tpu.vector_store %arg8[%c0, %c0_0, %c0_1], %0 {strides = array<i32>} : memref<2x10x256xbf16, #tpu.memory_space<vmem>>, vector<2x1x256xbf16>,
    %c0_2 = arith.constant 0 : index
    %c9 = arith.constant 9 : index
    %c0_3 = arith.constant 0 : index
    %2 = vector.load %arg8[%c0_2, %c9, %c0_3] : memref<2x10x256xbf16, #tpu.memory_space<vmem>>, vector<2x1x256xbf16>
    tpu.vector_store %arg8[%c0_2, %c9, %c0_3], %0 {strides = array<i32>} : memref<2x10x256xbf16, #tpu.memory_space<vmem>>, vector<2x1x256xbf16>,
    %c0_4 = arith.constant 0 : index
    %c0_5 = arith.constant 0 : index
    %c0_6 = arith.constant 0 : index
    %3 = vector.load %arg1[%c0_4, %c0_5, %c0_6] : memref<2x8x256xf32, #tpu.memory_space<vmem>>, vector<2x8x256xf32>
    %c0_7 = arith.constant 0 : index
    %c0_8 = arith.constant 0 : index
    %4 = vector.load %arg4[%c0_7, %c0_8] : memref<2x256xf32, #tpu.memory_space<vmem>>, vector<2x256xf32>
    %5 = vector.extract_strided_slice %4 {offsets = [0, 0], sizes = [1, 256], strides = [1, 1]} : vector<2x256xf32> to vector<1x256xf32>
    %6 = vector.shape_cast %5 : vector<1x256xf32> to vector<1x1x256xf32>
    %7 = vector.extract_strided_slice %4 {offsets = [1, 0], sizes = [1, 256], strides = [1, 1]} : vector<2x256xf32> to vector<1x256xf32>
    %8 = vector.shape_cast %7 : vector<1x256xf32> to vector<1x1x256xf32>
    %9 = arith.truncf %3 : vector<2x8x256xf32> to vector<2x8x256xbf16>
    %10 = vector.extract_strided_slice %9 {offsets = [0, 0, 0], sizes = [1, 8, 256], strides = [1, 1, 1]} : vector<2x8x256xbf16> to vector<1x8x256xbf16>
    %c0_9 = arith.constant 0 : index
    %c1 = arith.constant 1 : index
    %c0_10 = arith.constant 0 : index
    %11 = vector.load %arg8[%c0_9, %c1, %c0_10] : memref<2x10x256xbf16, #tpu.memory_space<vmem>>, vector<1x8x256xbf16>
    tpu.vector_store %arg8[%c0_9, %c1, %c0_10], %10 {strides = array<i32>} : memref<2x10x256xbf16, #tpu.memory_space<vmem>>, vector<1x8x256xbf16>,
    %12 = vector.extract_strided_slice %9 {offsets = [1, 0, 0], sizes = [1, 8, 256], strides = [1, 1, 1]} : vector<2x8x256xbf16> to vector<1x8x256xbf16>
    %c1_11 = arith.constant 1 : index
    %c1_12 = arith.constant 1 : index
    %c0_13 = arith.constant 0 : index
    %13 = vector.load %arg8[%c1_11, %c1_12, %c0_13] : memref<2x10x256xbf16, #tpu.memory_space<vmem>>, vector<1x8x256xbf16>
    tpu.vector_store %arg8[%c1_11, %c1_12, %c0_13], %12 {strides = array<i32>} : memref<2x10x256xbf16, #tpu.memory_space<vmem>>, vector<1x8x256xbf16>,
    %c0_14 = arith.constant 0 : index
    %c0_15 = arith.constant 0 : index
    %c0_16 = arith.constant 0 : index
    %14 = vector.load %arg8[%c0_14, %c0_15, %c0_16] : memref<2x10x256xbf16, #tpu.memory_space<vmem>>, vector<1x8x256xbf16>
    %15 = vector.shape_cast %14 : vector<1x8x256xbf16> to vector<8x256xbf16>
    %c0_17 = arith.constant 0 : index
    %c1_18 = arith.constant 1 : index
    %c0_19 = arith.constant 0 : index
    %16 = vector.load %arg8[%c0_17, %c1_18, %c0_19] : memref<2x10x256xbf16, #tpu.memory_space<vmem>>, vector<1x8x256xbf16>
    %17 = vector.shape_cast %16 : vector<1x8x256xbf16> to vector<8x256xbf16>
    %c0_20 = arith.constant 0 : index
    %c2 = arith.constant 2 : index
    %c0_21 = arith.constant 0 : index
    %18 = vector.load %arg8[%c0_20, %c2, %c0_21] : memref<2x10x256xbf16, #tpu.memory_space<vmem>>, vector<1x8x256xbf16>
    %19 = vector.shape_cast %18 : vector<1x8x256xbf16> to vector<8x256xbf16>
    %c0_22 = arith.constant 0 : index
    %c0_23 = arith.constant 0 : index
    %c0_24 = arith.constant 0 : index
    %20 = vector.load %arg2[%c0_22, %c0_23, %c0_24] : memref<3x256x256xbf16, #tpu.memory_space<vmem>>, vector<1x256x256xbf16>
    %21 = vector.shape_cast %20 : vector<1x256x256xbf16> to vector<256x256xbf16>
    %cst_25 = arith.constant dense<0.000000e+00> : vector<8x256xf32>
    %22 = tpu.matmul %15, %21, %cst_25 {dimension_numbers = #tpu.dot_dimension_numbers<[1], [0], [0], [1], [0, 0, 1, 1], [], []>} : vector<8x256xbf16>, vector<256x256xbf16>, vector<8x256xf32> -> vector<8x256xf32>
    %c1_26 = arith.constant 1 : index
    %c0_27 = arith.constant 0 : index
    %c0_28 = arith.constant 0 : index
    %23 = vector.load %arg2[%c1_26, %c0_27, %c0_28] : memref<3x256x256xbf16, #tpu.memory_space<vmem>>, vector<1x256x256xbf16>
    %24 = vector.shape_cast %23 : vector<1x256x256xbf16> to vector<256x256xbf16>
    %cst_29 = arith.constant dense<0.000000e+00> : vector<8x256xf32>
    %25 = tpu.matmul %17, %24, %cst_29 {dimension_numbers = #tpu.dot_dimension_numbers<[1], [0], [0], [1], [0, 0, 1, 1], [], []>} : vector<8x256xbf16>, vector<256x256xbf16>, vector<8x256xf32> -> vector<8x256xf32>
    %26 = arith.addf %22, %25 : vector<8x256xf32>
    %c2_30 = arith.constant 2 : index
    %c0_31 = arith.constant 0 : index
    %c0_32 = arith.constant 0 : index
    %27 = vector.load %arg2[%c2_30, %c0_31, %c0_32] : memref<3x256x256xbf16, #tpu.memory_space<vmem>>, vector<1x256x256xbf16>
    %28 = vector.shape_cast %27 : vector<1x256x256xbf16> to vector<256x256xbf16>
    %cst_33 = arith.constant dense<0.000000e+00> : vector<8x256xf32>
    %29 = tpu.matmul %19, %28, %cst_33 {dimension_numbers = #tpu.dot_dimension_numbers<[1], [0], [0], [1], [0, 0, 1, 1], [], []>} : vector<8x256xbf16>, vector<256x256xbf16>, vector<8x256xf32> -> vector<8x256xf32>
    %30 = arith.addf %26, %29 : vector<8x256xf32>
    %c1_34 = arith.constant 1 : index
    %c0_35 = arith.constant 0 : index
    %c0_36 = arith.constant 0 : index
    %31 = vector.load %arg8[%c1_34, %c0_35, %c0_36] : memref<2x10x256xbf16, #tpu.memory_space<vmem>>, vector<1x8x256xbf16>
    %32 = vector.shape_cast %31 : vector<1x8x256xbf16> to vector<8x256xbf16>
    %c1_37 = arith.constant 1 : index
    %c1_38 = arith.constant 1 : index
    %c0_39 = arith.constant 0 : index
    %33 = vector.load %arg8[%c1_37, %c1_38, %c0_39] : memref<2x10x256xbf16, #tpu.memory_space<vmem>>, vector<1x8x256xbf16>
    %34 = vector.shape_cast %33 : vector<1x8x256xbf16> to vector<8x256xbf16>
    %c1_40 = arith.constant 1 : index
    %c2_41 = arith.constant 2 : index
    %c0_42 = arith.constant 0 : index
    %35 = vector.load %arg8[%c1_40, %c2_41, %c0_42] : memref<2x10x256xbf16, #tpu.memory_space<vmem>>, vector<1x8x256xbf16>
    %36 = vector.shape_cast %35 : vector<1x8x256xbf16> to vector<8x256xbf16>
    %c0_43 = arith.constant 0 : index
    %c0_44 = arith.constant 0 : index
    %c0_45 = arith.constant 0 : index
    %37 = vector.load %arg2[%c0_43, %c0_44, %c0_45] : memref<3x256x256xbf16, #tpu.memory_space<vmem>>, vector<1x256x256xbf16>
    %38 = vector.shape_cast %37 : vector<1x256x256xbf16> to vector<256x256xbf16>
    %cst_46 = arith.constant dense<0.000000e+00> : vector<8x256xf32>
    %39 = tpu.matmul %32, %38, %cst_46 {dimension_numbers = #tpu.dot_dimension_numbers<[1], [0], [0], [1], [0, 0, 1, 1], [], []>} : vector<8x256xbf16>, vector<256x256xbf16>, vector<8x256xf32> -> vector<8x256xf32>
    %c1_47 = arith.constant 1 : index
    %c0_48 = arith.constant 0 : index
    %c0_49 = arith.constant 0 : index
    %40 = vector.load %arg2[%c1_47, %c0_48, %c0_49] : memref<3x256x256xbf16, #tpu.memory_space<vmem>>, vector<1x256x256xbf16>
    %41 = vector.shape_cast %40 : vector<1x256x256xbf16> to vector<256x256xbf16>
    %cst_50 = arith.constant dense<0.000000e+00> : vector<8x256xf32>
    %42 = tpu.matmul %34, %41, %cst_50 {dimension_numbers = #tpu.dot_dimension_numbers<[1], [0], [0], [1], [0, 0, 1, 1], [], []>} : vector<8x256xbf16>, vector<256x256xbf16>, vector<8x256xf32> -> vector<8x256xf32>
    %43 = arith.addf %39, %42 : vector<8x256xf32>
    %c2_51 = arith.constant 2 : index
    %c0_52 = arith.constant 0 : index
    %c0_53 = arith.constant 0 : index
    %44 = vector.load %arg2[%c2_51, %c0_52, %c0_53] : memref<3x256x256xbf16, #tpu.memory_space<vmem>>, vector<1x256x256xbf16>
    %45 = vector.shape_cast %44 : vector<1x256x256xbf16> to vector<256x256xbf16>
    %cst_54 = arith.constant dense<0.000000e+00> : vector<8x256xf32>
    %46 = tpu.matmul %36, %45, %cst_54 {dimension_numbers = #tpu.dot_dimension_numbers<[1], [0], [0], [1], [0, 0, 1, 1], [], []>} : vector<8x256xbf16>, vector<256x256xbf16>, vector<8x256xf32> -> vector<8x256xf32>
    %47 = arith.addf %43, %46 : vector<8x256xf32>
    %48 = vector.shape_cast %30 : vector<8x256xf32> to vector<1x8x256xf32>
    %49 = vector.shape_cast %47 : vector<8x256xf32> to vector<1x8x256xf32>
    %50 = tpu.concatenate %48, %49 in 0 : vector<1x8x256xf32>, vector<1x8x256xf32> -> vector<2x8x256xf32>
    %51 = vector.broadcast %6 : vector<1x1x256xf32> to vector<2x8x256xf32>
    %52 = arith.addf %50, %51 : vector<2x8x256xf32>
    %cst_55 = arith.constant 0.000000e+00 : f32
    %53 = vector.broadcast %cst_55 : f32 to vector<2x8x256xf32>
    %54 = arith.maximumf %52, %53 : vector<2x8x256xf32>
    %55 = arith.truncf %54 : vector<2x8x256xf32> to vector<2x8x256xbf16>
    %56 = vector.extract_strided_slice %55 {offsets = [0, 0, 0], sizes = [1, 8, 256], strides = [1, 1, 1]} : vector<2x8x256xbf16> to vector<1x8x256xbf16>
    %c0_56 = arith.constant 0 : index
    %c1_57 = arith.constant 1 : index
    %c0_58 = arith.constant 0 : index
    %57 = vector.load %arg8[%c0_56, %c1_57, %c0_58] : memref<2x10x256xbf16, #tpu.memory_space<vmem>>, vector<1x8x256xbf16>
    tpu.vector_store %arg8[%c0_56, %c1_57, %c0_58], %56 {strides = array<i32>} : memref<2x10x256xbf16, #tpu.memory_space<vmem>>, vector<1x8x256xbf16>,
    %58 = vector.extract_strided_slice %55 {offsets = [1, 0, 0], sizes = [1, 8, 256], strides = [1, 1, 1]} : vector<2x8x256xbf16> to vector<1x8x256xbf16>
    %c1_59 = arith.constant 1 : index
    %c1_60 = arith.constant 1 : index
    %c0_61 = arith.constant 0 : index
    %59 = vector.load %arg8[%c1_59, %c1_60, %c0_61] : memref<2x10x256xbf16, #tpu.memory_space<vmem>>, vector<1x8x256xbf16>
    tpu.vector_store %arg8[%c1_59, %c1_60, %c0_61], %58 {strides = array<i32>} : memref<2x10x256xbf16, #tpu.memory_space<vmem>>, vector<1x8x256xbf16>,
    %c0_62 = arith.constant 0 : index
    %c0_63 = arith.constant 0 : index
    %c0_64 = arith.constant 0 : index
    %60 = vector.load %arg8[%c0_62, %c0_63, %c0_64] : memref<2x10x256xbf16, #tpu.memory_space<vmem>>, vector<1x8x256xbf16>
    %61 = vector.shape_cast %60 : vector<1x8x256xbf16> to vector<8x256xbf16>
    %c0_65 = arith.constant 0 : index
    %c1_66 = arith.constant 1 : index
    %c0_67 = arith.constant 0 : index
    %62 = vector.load %arg8[%c0_65, %c1_66, %c0_67] : memref<2x10x256xbf16, #tpu.memory_space<vmem>>, vector<1x8x256xbf16>
    %63 = vector.shape_cast %62 : vector<1x8x256xbf16> to vector<8x256xbf16>
    %c0_68 = arith.constant 0 : index
    %c2_69 = arith.constant 2 : index
    %c0_70 = arith.constant 0 : index
    %64 = vector.load %arg8[%c0_68, %c2_69, %c0_70] : memref<2x10x256xbf16, #tpu.memory_space<vmem>>, vector<1x8x256xbf16>
    %65 = vector.shape_cast %64 : vector<1x8x256xbf16> to vector<8x256xbf16>
    %c0_71 = arith.constant 0 : index
    %c0_72 = arith.constant 0 : index
    %c0_73 = arith.constant 0 : index
    %66 = vector.load %arg3[%c0_71, %c0_72, %c0_73] : memref<3x256x256xbf16, #tpu.memory_space<vmem>>, vector<1x256x256xbf16>
    %67 = vector.shape_cast %66 : vector<1x256x256xbf16> to vector<256x256xbf16>
    %cst_74 = arith.constant dense<0.000000e+00> : vector<8x256xf32>
    %68 = tpu.matmul %61, %67, %cst_74 {dimension_numbers = #tpu.dot_dimension_numbers<[1], [0], [0], [1], [0, 0, 1, 1], [], []>} : vector<8x256xbf16>, vector<256x256xbf16>, vector<8x256xf32> -> vector<8x256xf32>
    %c1_75 = arith.constant 1 : index
    %c0_76 = arith.constant 0 : index
    %c0_77 = arith.constant 0 : index
    %69 = vector.load %arg3[%c1_75, %c0_76, %c0_77] : memref<3x256x256xbf16, #tpu.memory_space<vmem>>, vector<1x256x256xbf16>
    %70 = vector.shape_cast %69 : vector<1x256x256xbf16> to vector<256x256xbf16>
    %cst_78 = arith.constant dense<0.000000e+00> : vector<8x256xf32>
    %71 = tpu.matmul %63, %70, %cst_78 {dimension_numbers = #tpu.dot_dimension_numbers<[1], [0], [0], [1], [0, 0, 1, 1], [], []>} : vector<8x256xbf16>, vector<256x256xbf16>, vector<8x256xf32> -> vector<8x256xf32>
    %72 = arith.addf %68, %71 : vector<8x256xf32>
    %c2_79 = arith.constant 2 : index
    %c0_80 = arith.constant 0 : index
    %c0_81 = arith.constant 0 : index
    %73 = vector.load %arg3[%c2_79, %c0_80, %c0_81] : memref<3x256x256xbf16, #tpu.memory_space<vmem>>, vector<1x256x256xbf16>
    %74 = vector.shape_cast %73 : vector<1x256x256xbf16> to vector<256x256xbf16>
    %cst_82 = arith.constant dense<0.000000e+00> : vector<8x256xf32>
    %75 = tpu.matmul %65, %74, %cst_82 {dimension_numbers = #tpu.dot_dimension_numbers<[1], [0], [0], [1], [0, 0, 1, 1], [], []>} : vector<8x256xbf16>, vector<256x256xbf16>, vector<8x256xf32> -> vector<8x256xf32>
    %76 = arith.addf %72, %75 : vector<8x256xf32>
    %c1_83 = arith.constant 1 : index
    %c0_84 = arith.constant 0 : index
    %c0_85 = arith.constant 0 : index
    %77 = vector.load %arg8[%c1_83, %c0_84, %c0_85] : memref<2x10x256xbf16, #tpu.memory_space<vmem>>, vector<1x8x256xbf16>
    %78 = vector.shape_cast %77 : vector<1x8x256xbf16> to vector<8x256xbf16>
    %c1_86 = arith.constant 1 : index
    %c1_87 = arith.constant 1 : index
    %c0_88 = arith.constant 0 : index
    %79 = vector.load %arg8[%c1_86, %c1_87, %c0_88] : memref<2x10x256xbf16, #tpu.memory_space<vmem>>, vector<1x8x256xbf16>
    %80 = vector.shape_cast %79 : vector<1x8x256xbf16> to vector<8x256xbf16>
    %c1_89 = arith.constant 1 : index
    %c2_90 = arith.constant 2 : index
    %c0_91 = arith.constant 0 : index
    %81 = vector.load %arg8[%c1_89, %c2_90, %c0_91] : memref<2x10x256xbf16, #tpu.memory_space<vmem>>, vector<1x8x256xbf16>
    %82 = vector.shape_cast %81 : vector<1x8x256xbf16> to vector<8x256xbf16>
    %c0_92 = arith.constant 0 : index
    %c0_93 = arith.constant 0 : index
    %c0_94 = arith.constant 0 : index
    %83 = vector.load %arg3[%c0_92, %c0_93, %c0_94] : memref<3x256x256xbf16, #tpu.memory_space<vmem>>, vector<1x256x256xbf16>
    %84 = vector.shape_cast %83 : vector<1x256x256xbf16> to vector<256x256xbf16>
    %cst_95 = arith.constant dense<0.000000e+00> : vector<8x256xf32>
    %85 = tpu.matmul %78, %84, %cst_95 {dimension_numbers = #tpu.dot_dimension_numbers<[1], [0], [0], [1], [0, 0, 1, 1], [], []>} : vector<8x256xbf16>, vector<256x256xbf16>, vector<8x256xf32> -> vector<8x256xf32>
    %c1_96 = arith.constant 1 : index
    %c0_97 = arith.constant 0 : index
    %c0_98 = arith.constant 0 : index
    %86 = vector.load %arg3[%c1_96, %c0_97, %c0_98] : memref<3x256x256xbf16, #tpu.memory_space<vmem>>, vector<1x256x256xbf16>
    %87 = vector.shape_cast %86 : vector<1x256x256xbf16> to vector<256x256xbf16>
    %cst_99 = arith.constant dense<0.000000e+00> : vector<8x256xf32>
    %88 = tpu.matmul %80, %87, %cst_99 {dimension_numbers = #tpu.dot_dimension_numbers<[1], [0], [0], [1], [0, 0, 1, 1], [], []>} : vector<8x256xbf16>, vector<256x256xbf16>, vector<8x256xf32> -> vector<8x256xf32>
    %89 = arith.addf %85, %88 : vector<8x256xf32>
    %c2_100 = arith.constant 2 : index
    %c0_101 = arith.constant 0 : index
    %c0_102 = arith.constant 0 : index
    %90 = vector.load %arg3[%c2_100, %c0_101, %c0_102] : memref<3x256x256xbf16, #tpu.memory_space<vmem>>, vector<1x256x256xbf16>
    %91 = vector.shape_cast %90 : vector<1x256x256xbf16> to vector<256x256xbf16>
    %cst_103 = arith.constant dense<0.000000e+00> : vector<8x256xf32>
    %92 = tpu.matmul %82, %91, %cst_103 {dimension_numbers = #tpu.dot_dimension_numbers<[1], [0], [0], [1], [0, 0, 1, 1], [], []>} : vector<8x256xbf16>, vector<256x256xbf16>, vector<8x256xf32> -> vector<8x256xf32>
    %93 = arith.addf %89, %92 : vector<8x256xf32>
    %94 = vector.shape_cast %76 : vector<8x256xf32> to vector<1x8x256xf32>
    %95 = vector.shape_cast %93 : vector<8x256xf32> to vector<1x8x256xf32>
    %96 = tpu.concatenate %94, %95 in 0 : vector<1x8x256xf32>, vector<1x8x256xf32> -> vector<2x8x256xf32>
    %97 = vector.broadcast %8 : vector<1x1x256xf32> to vector<2x8x256xf32>
    %98 = arith.addf %96, %97 : vector<2x8x256xf32>
    %cst_104 = arith.constant dense<0.000000e+00> : vector<2x256xf32>
    %99 = vector.multi_reduction <add>, %98, %cst_104 [1] : vector<2x8x256xf32> to vector<2x256xf32>
    %100 = vector.extract_strided_slice %99 {offsets = [0, 0], sizes = [2, 128], strides = [1, 1]} : vector<2x256xf32> to vector<2x128xf32>
    %101 = vector.extract_strided_slice %99 {offsets = [0, 128], sizes = [2, 128], strides = [1, 1]} : vector<2x256xf32> to vector<2x128xf32>
    %102 = arith.addf %100, %101 : vector<2x128xf32>
    %103 = vector.extract_strided_slice %102 {offsets = [0, 0], sizes = [2, 64], strides = [1, 1]} : vector<2x128xf32> to vector<2x64xf32>
    %104 = vector.extract_strided_slice %102 {offsets = [0, 64], sizes = [2, 64], strides = [1, 1]} : vector<2x128xf32> to vector<2x64xf32>
    %105 = arith.addf %103, %104 : vector<2x64xf32>
    %106 = vector.extract_strided_slice %105 {offsets = [0, 0], sizes = [2, 32], strides = [1, 1]} : vector<2x64xf32> to vector<2x32xf32>
    %107 = vector.extract_strided_slice %105 {offsets = [0, 32], sizes = [2, 32], strides = [1, 1]} : vector<2x64xf32> to vector<2x32xf32>
    %108 = arith.addf %106, %107 : vector<2x32xf32>
    %cst_105 = arith.constant 1.562500e-02 : f32
    %109 = vector.broadcast %cst_105 : f32 to vector<2x32xf32>
    %110 = arith.mulf %108, %109 : vector<2x32xf32>
    %c0_106 = arith.constant 0 : index
    %c0_107 = arith.constant 0 : index
    %111 = vector.load %arg5[%c0_106, %c0_107] : memref<2x32xf32, #tpu.memory_space<vmem>>, vector<2x32xf32>
    %c0_108 = arith.constant 0 : index
    %c0_109 = arith.constant 0 : index
    %112 = vector.load %arg6[%c0_108, %c0_109] : memref<2x32xf32, #tpu.memory_space<vmem>>, vector<2x32xf32>
    %cst_110 = arith.constant 0.000000e+00 : f32
    %113 = vector.broadcast %cst_110 : f32 to vector<2x32xf32>
    %114 = vector.extract_strided_slice %111 {offsets = [0, 0], sizes = [1, 32], strides = [1, 1]} : vector<2x32xf32> to vector<1x32xf32>
    %115 = vector.broadcast %114 : vector<1x32xf32> to vector<2x32xf32>
    %116 = arith.mulf %110, %115 : vector<2x32xf32>
    %cst_111 = arith.constant dense<0.000000e+00> : vector<2xf32>
    %117 = vector.multi_reduction <add>, %116, %cst_111 [1] : vector<2x32xf32> to vector<2xf32>
    %118 = vector.shape_cast %117 : vector<2xf32> to vector<2x1xf32>
    %cst_112 = arith.constant 0.000000e+00 : f32
    %119 = vector.broadcast %cst_112 : f32 to vector<2x1xf32>
    %120 = arith.maximumf %118, %119 : vector<2x1xf32>
    %121 = vector.extract_strided_slice %112 {offsets = [0, 0], sizes = [1, 32], strides = [1, 1]} : vector<2x32xf32> to vector<1x32xf32>
    %122 = vector.broadcast %120 : vector<2x1xf32> to vector<2x32xf32>
    %123 = vector.broadcast %121 : vector<1x32xf32> to vector<2x32xf32>
    %124 = arith.mulf %122, %123 : vector<2x32xf32>
    %125 = arith.addf %113, %124 : vector<2x32xf32>
    %126 = vector.extract_strided_slice %111 {offsets = [1, 0], sizes = [1, 32], strides = [1, 1]} : vector<2x32xf32> to vector<1x32xf32>
    %127 = vector.broadcast %126 : vector<1x32xf32> to vector<2x32xf32>
    %128 = arith.mulf %110, %127 : vector<2x32xf32>
    %cst_113 = arith.constant dense<0.000000e+00> : vector<2xf32>
    %129 = vector.multi_reduction <add>, %128, %cst_113 [1] : vector<2x32xf32> to vector<2xf32>
    %130 = vector.shape_cast %129 : vector<2xf32> to vector<2x1xf32>
    %cst_114 = arith.constant 0.000000e+00 : f32
    %131 = vector.broadcast %cst_114 : f32 to vector<2x1xf32>
    %132 = arith.maximumf %130, %131 : vector<2x1xf32>
    %133 = vector.extract_strided_slice %112 {offsets = [1, 0], sizes = [1, 32], strides = [1, 1]} : vector<2x32xf32> to vector<1x32xf32>
    %134 = vector.broadcast %132 : vector<2x1xf32> to vector<2x32xf32>
    %135 = vector.broadcast %133 : vector<1x32xf32> to vector<2x32xf32>
    %136 = arith.mulf %134, %135 : vector<2x32xf32>
    %137 = arith.addf %125, %136 : vector<2x32xf32>
    %138 = arith.negf %137 : vector<2x32xf32>
    %139 = math.exp %138 : vector<2x32xf32>
    %cst_115 = arith.constant 1.000000e+00 : f32
    %140 = vector.broadcast %cst_115 : f32 to vector<2x32xf32>
    %141 = arith.addf %140, %139 : vector<2x32xf32>
    %142 = arith.divf %140, %141 : vector<2x32xf32>
    %143 = tpu.concatenate %142, %142, %142, %142, %142, %142, %142, %142 in 1 : vector<2x32xf32>, vector<2x32xf32>, vector<2x32xf32>, vector<2x32xf32>, vector<2x32xf32>, vector<2x32xf32>, vector<2x32xf32>, vector<2x32xf32> -> vector<2x256xf32>
    %144 = vector.shape_cast %143 : vector<2x256xf32> to vector<2x1x256xf32>
    %145 = vector.broadcast %144 : vector<2x1x256xf32> to vector<2x8x256xf32>
    %146 = arith.mulf %98, %145 : vector<2x8x256xf32>
    %147 = arith.addf %146, %3 : vector<2x8x256xf32>
    %cst_116 = arith.constant 0.000000e+00 : f32
    %148 = vector.broadcast %cst_116 : f32 to vector<2x8x256xf32>
    %149 = arith.maximumf %147, %148 : vector<2x8x256xf32>
    %c0_117 = arith.constant 0 : index
    %c0_118 = arith.constant 0 : index
    %c0_119 = arith.constant 0 : index
    %150 = vector.load %arg7[%c0_117, %c0_118, %c0_119] : memref<2x8x256xf32, #tpu.memory_space<vmem>>, vector<2x8x256xf32>
    tpu.vector_store %arg7[%c0_117, %c0_118, %c0_119], %149 {strides = array<i32>} : memref<2x8x256xf32, #tpu.memory_space<vmem>>, vector<2x8x256xf32>,
    return
  }
  func.func @transform_0(%arg0: i32) -> (i32, i32, i32) {
    %c0_i32 = arith.constant 0 : i32
    %c0_i32_0 = arith.constant 0 : i32
    %c0_i32_1 = arith.constant 0 : i32
    %c0_i32_2 = arith.constant 0 : i32
    return %c0_i32, %c0_i32_0, %c0_i32_1 : i32, i32, i32
  }
  func.func @transform_1(%arg0: i32) -> (i32, i32, i32) {
    %c0_i32 = arith.constant 0 : i32
    %c0_i32_0 = arith.constant 0 : i32
    %c0_i32_1 = arith.constant 0 : i32
    %c0_i32_2 = arith.constant 0 : i32
    return %c0_i32, %c0_i32_0, %c0_i32_1 : i32, i32, i32
  }
  func.func @transform_2(%arg0: i32) -> (i32, i32, i32) {
    %c0_i32 = arith.constant 0 : i32
    %c0_i32_0 = arith.constant 0 : i32
    %c0_i32_1 = arith.constant 0 : i32
    %c0_i32_2 = arith.constant 0 : i32
    return %c0_i32, %c0_i32_0, %c0_i32_1 : i32, i32, i32
  }
  func.func @transform_3(%arg0: i32) -> (i32, i32) {
    %c0_i32 = arith.constant 0 : i32
    %c0_i32_0 = arith.constant 0 : i32
    %c0_i32_1 = arith.constant 0 : i32
    return %c0_i32, %c0_i32_0 : i32, i32
  }
  func.func @transform_4(%arg0: i32) -> (i32, i32) {
    %c0_i32 = arith.constant 0 : i32
    %c0_i32_0 = arith.constant 0 : i32
    %c0_i32_1 = arith.constant 0 : i32
    return %c0_i32, %c0_i32_0 : i32, i32
  }
  func.func @transform_5(%arg0: i32) -> (i32, i32) {
    %c0_i32 = arith.constant 0 : i32
    %c0_i32_0 = arith.constant 0 : i32
    %c0_i32_1 = arith.constant 0 : i32
    return %c0_i32, %c0_i32_0 : i32, i32
  }
  func.func @transform_6(%arg0: i32) -> (i32, i32, i32) {
    %c0_i32 = arith.constant 0 : i32
    %c0_i32_0 = arith.constant 0 : i32
    %c0_i32_1 = arith.constant 0 : i32
    %c0_i32_2 = arith.constant 0 : i32
    return %c0_i32, %c0_i32_0, %c0_i32_1 : i32, i32, i32
  }
}

</mosaic_0001>

<llo_original>
// kernel: tpu_custom_call.1
$region0: #{tpu_custom_call.1}
  #allocation0 [shape = 'u32[]', space=smem, size = 0x4, offset = 0x4, fixed_abs, tag = 'smem constant byte address 0x4 - core index']
  #allocation1 [shape = 'u32[144,128]{1,0:T(1,128)}', space=vmem, size = 0x12000, scoped, tag = 'internal scratch']
  #allocation2 [shape = 'bf16[2,10,256]{2,1,0:T(8,128)(2,1)}', space=vmem, size = 0x4000, scoped, tag = 'scratch operand']
  %s0 = inlined_call_operand.hbm [shape: f32[2,8,256], index: 0, kind: input, shape index: {}]
  %s1 = inlined_call_operand.hbm [shape: bf16[3,256,256], index: 1, kind: input, shape index: {}]
  %s2 = inlined_call_operand.hbm [shape: bf16[3,256,256], index: 2, kind: input, shape index: {}]
  %s3 = inlined_call_operand.vmem [shape: f32[2,256], index: 3, kind: input, shape index: {}]
  %s4 = inlined_call_operand.vmem [shape: f32[2,32], index: 4, kind: input, shape index: {}]
  %s5 = inlined_call_operand.vmem [shape: f32[2,32], index: 5, kind: input, shape index: {}]
  %s6 = inlined_call_operand.hbm [shape: f32[2,8,256], index: 6, kind: output, shape index: {}]
  %s7 = sld [smem:[#allocation0]]
  $region46: #{tpu_custom_call.1} parent=0
    _
  %s9 = ssub.s32 1, %s7
  %s10 = scalar_select 0, %s9, %s7
  $region1: #{tpu_custom_call.1} parent=0
    #allocation3 [shape = 'u8[16384]{0}', space=vmem, size = 0x4000, scoped, tag = 'input window, operand 0, single buffered']
    #allocation4 [shape = 's32[1]{0}', space=sflag, size = 0x4, scoped, tag = 'scoped memory for tpu_custom_call.1']
    #allocation5 [shape = 's32[1]{0}', space=sflag, size = 0x4, scoped, tag = 'scoped memory for tpu_custom_call.1']
    #allocation6 [shape = 'u8[393216]{0}', space=vmem, size = 0x60000, scoped, tag = 'input window, operand 1, single buffered']
    #allocation7 [shape = 's32[1]{0}', space=sflag, size = 0x4, scoped, tag = 'scoped memory for tpu_custom_call.1']
    #allocation8 [shape = 'u8[393216]{0}', space=vmem, size = 0x60000, scoped, tag = 'input window, operand 2, single buffered']
    #allocation9 [shape = 'u8[16384]{0}', space=vmem, size = 0x4000, scoped, tag = 'output window, operand 0, single buffered']
    %11 = vsyncpa [#allocation4], 0
    %12 = vsyncpa [#allocation7], 0
    %13 = vsyncpa [#allocation5], 0
    // Predicated region
    $region2: #{tpu_custom_call.1} parent=1 // pred_check
      _
    $region3: #{tpu_custom_call.1} parent=1 // pred_check_branch
      %15 = sbr.rel (0) target = $region5
    $region4: #{tpu_custom_call.1} parent=1 // pred_region
      %s17 = ssub.s32 512, 512
      %18 = vsyncadd [#allocation4], %s17
      %s19 = sshll.u32 [#allocation3], 4
      %s20 = int_to_ptr.vmem [resolvable:$true] %s19
      %25 = dma.hbm_to_vmem [thread:$0]  %s0, 512, %s20, [#allocation4], 256, 256, 16
    $region5: #{tpu_custom_call.1} parent=1 // pred_fallthru
      _
    // Predicated region
    $region6: #{tpu_custom_call.1} parent=1 // pred_check
      _
    $region7: #{tpu_custom_call.1} parent=1 // pred_check_branch
      %27 = sbr.rel (0) target = $region9
    $region8: #{tpu_custom_call.1} parent=1 // pred_region
      %s29 = ssub.s32 12288, 12288
      %30 = vsyncadd [#allocation7], %s29
      %s31 = sshll.u32 [#allocation6], 4
      %s32 = int_to_ptr.vmem [resolvable:$true] %s31
      %37 = dma.hbm_to_vmem [thread:$0]  %s1, 12288, %s32, [#allocation7], 128, 128, 8
    $region9: #{tpu_custom_call.1} parent=1 // pred_fallthru
      _
    // Predicated region
    $region10: #{tpu_custom_call.1} parent=1 // pred_check
      _
    $region11: #{tpu_custom_call.1} parent=1 // pred_check_branch
      %39 = sbr.rel (0) target = $region13
    $region12: #{tpu_custom_call.1} parent=1 // pred_region
      %s41 = ssub.s32 12288, 12288
      %42 = vsyncadd [#allocation7], %s41
      %s43 = sshll.u32 [#allocation8], 4
      %s44 = int_to_ptr.vmem [resolvable:$true] %s43
      %49 = dma.hbm_to_vmem [thread:$0]  %s2, 12288, %s44, [#allocation7], 128, 128, 8
    $region13: #{tpu_custom_call.1} parent=1 // pred_fallthru
      _
    // Predicated region
    $region14: #{tpu_custom_call.1} parent=1 // pred_check
      _
    $region15: #{tpu_custom_call.1} parent=1 // pred_check_branch
      %51 = sbr.rel (0) target = $region17
    $region16: #{tpu_custom_call.1} parent=1 // pred_region
      _
    $region17: #{tpu_custom_call.1} parent=1 // pred_fallthru
      _
    // Predicated region
    $region18: #{tpu_custom_call.1} parent=1 // pred_check
      _
    $region19: #{tpu_custom_call.1} parent=1 // pred_check_branch
      %53 = sbr.rel (0) target = $region21
    $region20: #{tpu_custom_call.1} parent=1 // pred_region
      _
    $region21: #{tpu_custom_call.1} parent=1 // pred_fallthru
      _
    // Predicated region
    $region22: #{tpu_custom_call.1} parent=1 // pred_check
      _
    $region23: #{tpu_custom_call.1} parent=1 // pred_check_branch
      %55 = sbr.rel (0) target = $region25
    $region24: #{tpu_custom_call.1} parent=1 // pred_region
      _
    $region25: #{tpu_custom_call.1} parent=1 // pred_fallthru
      _
    // Predicated region
    $region26: #{tpu_custom_call.1} parent=1 // pred_check
      _
    $region27: #{tpu_custom_call.1} parent=1 // pred_check_branch
      %57 = sbr.rel (0) target = $region29
    $region28: #{tpu_custom_call.1} parent=1 // pred_region
      %58 = dma.done [#allocation4], 512
    $region29: #{tpu_custom_call.1} parent=1 // pred_fallthru
      _
    // Predicated region
    $region30: #{tpu_custom_call.1} parent=1 // pred_check
      _
    $region31: #{tpu_custom_call.1} parent=1 // pred_check_branch
      %60 = sbr.rel (0) target = $region33
    $region32: #{tpu_custom_call.1} parent=1 // pred_region
      %61 = dma.done [#allocation7], 12288
    $region33: #{tpu_custom_call.1} parent=1 // pred_fallthru
      _
    // Predicated region
    $region34: #{tpu_custom_call.1} parent=1 // pred_check
      _
    $region35: #{tpu_custom_call.1} parent=1 // pred_check_branch
      %63 = sbr.rel (0) target = $region37
    $region36: #{tpu_custom_call.1} parent=1 // pred_region
      %64 = dma.done [#allocation7], 12288
    $region37: #{tpu_custom_call.1} parent=1 // pred_fallthru
      _
    %vm66 = vcmask 1040384
    %vm67 = vsmask.f32 256
    %vm68 = vmand %vm66, %vm67
    %vm69 = vcmask 1044484
    %vm70 = vsmask.f32 4352
    %vm71 = vmand %vm69, %vm70
    %vm72 = vmor %vm71, %vm68
    %v73 = vld [vmem:[#allocation2] sm:$0x11]
    %v74 = vsel %vm72, 0, %v73
    %75 = vst [vmem:[#allocation2] sm:$0x11] %v74
    %v76 = vld [vmem:[#allocation2 + $0x10] sm:$0x11]
    %v77 = vsel %vm72, 0, %v76
    %78 = vst [vmem:[#allocation2 + $0x10] sm:$0x11] %v77
    %vm79 = vsmask.f32 7938
    %vm80 = vmand %vm66, %vm79
    %vm81 = vsmask.f32 7954
    %vm82 = vmand %vm69, %vm81
    %vm83 = vmor %vm82, %vm80
    %v84 = vld [vmem:[#allocation2 + $0x8] sm:$0x11]
    %v85 = vsel %vm83, 0, %v84
    %86 = vst [vmem:[#allocation2 + $0x8] sm:$0x11] %v85
    %v87 = vld [vmem:[#allocation2 + $0x18] sm:$0x11]
    %v88 = vsel %vm83, 0, %v87
    %89 = vst [vmem:[#allocation2 + $0x18] sm:$0x11] %v88
    %v90 = vld [vmem:[#allocation3] sm:$0xff]
    %v91 = vld [vmem:[#allocation3 + $0x8] sm:$0xff]
    %v92 = vld [vmem:[#allocation3 + $0x10] sm:$0xff]
    %v93 = vld [vmem:[#allocation3 + $0x18] sm:$0xff]
    %v94 = vld [vmem:[%s3] sm:$0xf]
    %v95 = vpack.c.bf16 %v90, %v90
    %v96 = vpack.c.bf16 %v91, %v91
    %v97 = vpack.c.bf16 %v92, %v92
    %v98 = vpack.c.bf16 %v93, %v93
    %v101 = vunpack.c.l.b16 %v95
    %v102 = vunpack.c.l.b16 %v96
    %v103 = vpack.c.b16 %v102, %v101
    %v105 = vshrl.u32 %v103, 16
    %v107 = vrot.slane %v105, 7
    %v108 = vshll.u32 %v103, 16
    %v110 = vor.u32 %v107, %v108
    %v111 = vrot.slane %v107, 4
    %vm114 = vcmask 1043456
    %vm115 = vmand %vm114, %vm79
    %vm116 = vcmask 1047556
    %vm117 = vmand %vm116, %vm81
    %vm118 = vmor %vm117, %vm115
    %v119 = vld [vmem:[#allocation2] sm:$0xff]
    %v120 = vsel %vm118, %v110, %v119
    %121 = vst [vmem:[#allocation2] sm:$0xff] %v120
    %v122 = vld [vmem:[#allocation2 + $0x8] sm:$0x11]
    %v123 = vsel %vm72, %v111, %v122
    %124 = vst [vmem:[#allocation2 + $0x8] sm:$0x11] %v123
    %v127 = vunpack.c.l.b16 %v97
    %v128 = vunpack.c.l.b16 %v98
    %v129 = vpack.c.b16 %v128, %v127
    %v131 = vshrl.u32 %v129, 16
    %v133 = vrot.slane %v131, 7
    %v134 = vshll.u32 %v129, 16
    %v136 = vor.u32 %v133, %v134
    %v137 = vrot.slane %v133, 4
    %s140 = scalar_lea.vmem [#allocation2], 16
    %v141 = vld [vmem:[%s140] sm:$0xff]
    %v142 = vsel %vm118, %v136, %v141
    %143 = vst [vmem:[%s140] sm:$0xff] %v142
    %v144 = vld [vmem:[%s140 + $0x8] sm:$0x11]
    %v145 = vsel %vm72, %v137, %v144
    %146 = vst [vmem:[%s140 + $0x8] sm:$0x11] %v145
    %v147 = vld [vmem:[#allocation2] sm:$0xff]
    %v148 = vld [vmem:[#allocation2 + $0x8] sm:$0x11]
    %v149 = vld [vmem:[#allocation2] sm:$0xee]
    %v150 = vld [vmem:[#allocation6] sm:$0xff]
    %v151 = vld [vmem:[#allocation6 + $0x8] sm:$0xff]
    %v152 = vld [vmem:[#allocation6 + $0x10] sm:$0xff]
    %v153 = vld [vmem:[#allocation6 + $0x18] sm:$0xff]
    %v154 = vld [vmem:[#allocation6 + $0x20] sm:$0xff]
    %v155 = vld [vmem:[#allocation6 + $0x28] sm:$0xff]
    %v156 = vld [vmem:[#allocation6 + $0x30] sm:$0xff]
    %v157 = vld [vmem:[#allocation6 + $0x38] sm:$0xff]
    %v158 = vld [vmem:[#allocation6 + $0x40] sm:$0xff]
    %v159 = vld [vmem:[#allocation6 + $0x48] sm:$0xff]
    %v160 = vld [vmem:[#allocation6 + $0x50] sm:$0xff]
    %v161 = vld [vmem:[#allocation6 + $0x58] sm:$0xff]
    %v162 = vld [vmem:[#allocation6 + $0x60] sm:$0xff]
    %v163 = vld [vmem:[#allocation6 + $0x68] sm:$0xff]
    %v164 = vld [vmem:[#allocation6 + $0x70] sm:$0xff]
    %v165 = vld [vmem:[#allocation6 + $0x78] sm:$0xff]
    %v166 = vld [vmem:[#allocation6 + $0x80] sm:$0xff]
    %v167 = vld [vmem:[#allocation6 + $0x88] sm:$0xff]
    %v168 = vld [vmem:[#allocation6 + $0x90] sm:$0xff]
    %v169 = vld [vmem:[#allocation6 + $0x98] sm:$0xff]
    %v170 = vld [vmem:[#allocation6 + $0xa0] sm:$0xff]
    %v171 = vld [vmem:[#allocation6 + $0xa8] sm:$0xff]
    %v172 = vld [vmem:[#allocation6 + $0xb0] sm:$0xff]
    %v173 = vld [vmem:[#allocation6 + $0xb8] sm:$0xff]
    %v174 = vld [vmem:[#allocation6 + $0xc0] sm:$0xff]
    %v175 = vld [vmem:[#allocation6 + $0xc8] sm:$0xff]
    %v176 = vld [vmem:[#allocation6 + $0xd0] sm:$0xff]
    %v177 = vld [vmem:[#allocation6 + $0xd8] sm:$0xff]
    %v178 = vld [vmem:[#allocation6 + $0xe0] sm:$0xff]
    %v179 = vld [vmem:[#allocation6 + $0xe8] sm:$0xff]
    %v180 = vld [vmem:[#allocation6 + $0xf0] sm:$0xff]
    %v181 = vld [vmem:[#allocation6 + $0xf8] sm:$0xff]
    %s182 = scalar_lea.vmem [#allocation6], 256
    %v183 = vld [vmem:[%s182] sm:$0xff]
    %v184 = vld [vmem:[%s182 + $0x8] sm:$0xff]
    %v185 = vld [vmem:[%s182 + $0x10] sm:$0xff]
    %v186 = vld [vmem:[%s182 + $0x18] sm:$0xff]
    %v187 = vld [vmem:[%s182 + $0x20] sm:$0xff]
    %v188 = vld [vmem:[%s182 + $0x28] sm:$0xff]
    %v189 = vld [vmem:[%s182 + $0x30] sm:$0xff]
    %v190 = vld [vmem:[%s182 + $0x38] sm:$0xff]
    %v191 = vld [vmem:[%s182 + $0x40] sm:$0xff]
    %v192 = vld [vmem:[%s182 + $0x48] sm:$0xff]
    %v193 = vld [vmem:[%s182 + $0x50] sm:$0xff]
    %v194 = vld [vmem:[%s182 + $0x58] sm:$0xff]
    %v195 = vld [vmem:[%s182 + $0x60] sm:$0xff]
    %v196 = vld [vmem:[%s182 + $0x68] sm:$0xff]
    %v197 = vld [vmem:[%s182 + $0x70] sm:$0xff]
    %v198 = vld [vmem:[%s182 + $0x78] sm:$0xff]
    %v199 = vld [vmem:[%s182 + $0x80] sm:$0xff]
    %v200 = vld [vmem:[%s182 + $0x88] sm:$0xff]
    %v201 = vld [vmem:[%s182 + $0x90] sm:$0xff]
    %v202 = vld [vmem:[%s182 + $0x98] sm:$0xff]
    %v203 = vld [vmem:[%s182 + $0xa0] sm:$0xff]
    %v204 = vld [vmem:[%s182 + $0xa8] sm:$0xff]
    %v205 = vld [vmem:[%s182 + $0xb0] sm:$0xff]
    %v206 = vld [vmem:[%s182 + $0xb8] sm:$0xff]
    %v207 = vld [vmem:[%s182 + $0xc0] sm:$0xff]
    %v208 = vld [vmem:[%s182 + $0xc8] sm:$0xff]
    %v209 = vld [vmem:[%s182 + $0xd0] sm:$0xff]
    %v210 = vld [vmem:[%s182 + $0xd8] sm:$0xff]
    %v211 = vld [vmem:[%s182 + $0xe0] sm:$0xff]
    %v212 = vld [vmem:[%s182 + $0xe8] sm:$0xff]
    %v213 = vld [vmem:[%s182 + $0xf0] sm:$0xff]
    %v214 = vld [vmem:[%s182 + $0xf8] sm:$0xff]
    %v217 = vunpack.c.l.b16 %v147
    %v218 = vunpack.c.h.b16 %v147
    %v219 = vunpack.c.l.b16 %v148
    %v220 = vunpack.c.h.b16 %v148
    %v221 = vpack.c.b16 %v219, %v217
    %v222 = vpack.c.b16 %v220, %v218
    %v224 = vshrl.u32 %v221, 16
    %v226 = vshll.u32 %v221, 16
    %v228 = vrot.slane %v226, 1
    %v229 = vor.u32 %v224, %v228
    %v231 = vshrl.u32 %v222, 16
    %v233 = vshll.u32 %v222, 16
    %v235 = vrot.slane %v233, 1
    %v236 = vor.u32 %v231, %v235
    %v271 = vunpack.c.l.b16 %v183
    %v272 = vunpack.c.h.b16 %v183
    %v273 = vunpack.c.l.b16 %v184
    %v274 = vunpack.c.h.b16 %v184
    %v275 = vunpack.c.l.b16 %v185
    %v276 = vunpack.c.h.b16 %v185
    %v277 = vunpack.c.l.b16 %v186
    %v278 = vunpack.c.h.b16 %v186
    %v279 = vunpack.c.l.b16 %v187
    %v280 = vunpack.c.h.b16 %v187
    %v281 = vunpack.c.l.b16 %v188
    %v282 = vunpack.c.h.b16 %v188
    %v283 = vunpack.c.l.b16 %v189
    %v284 = vunpack.c.h.b16 %v189
    %v285 = vunpack.c.l.b16 %v190
    %v286 = vunpack.c.h.b16 %v190
    %v287 = vunpack.c.l.b16 %v191
    %v288 = vunpack.c.h.b16 %v191
    %v289 = vunpack.c.l.b16 %v192
    %v290 = vunpack.c.h.b16 %v192
    %v291 = vunpack.c.l.b16 %v193
    %v292 = vunpack.c.h.b16 %v193
    %v293 = vunpack.c.l.b16 %v194
    %v294 = vunpack.c.h.b16 %v194
    %v295 = vunpack.c.l.b16 %v195
    %v296 = vunpack.c.h.b16 %v195
    %v297 = vunpack.c.l.b16 %v196
    %v298 = vunpack.c.h.b16 %v196
    %v299 = vunpack.c.l.b16 %v197
    %v300 = vunpack.c.h.b16 %v197
    %v301 = vunpack.c.l.b16 %v198
    %v302 = vunpack.c.h.b16 %v198
    %v303 = vunpack.c.l.b16 %v199
    %v304 = vunpack.c.h.b16 %v199
    %v305 = vunpack.c.l.b16 %v200
    %v306 = vunpack.c.h.b16 %v200
    %v307 = vunpack.c.l.b16 %v201
    %v308 = vunpack.c.h.b16 %v201
    %v309 = vunpack.c.l.b16 %v202
    %v310 = vunpack.c.h.b16 %v202
    %v311 = vunpack.c.l.b16 %v203
    %v312 = vunpack.c.h.b16 %v203
    %v313 = vunpack.c.l.b16 %v204
    %v314 = vunpack.c.h.b16 %v204
    %v315 = vunpack.c.l.b16 %v205
    %v316 = vunpack.c.h.b16 %v205
    %v317 = vunpack.c.l.b16 %v206
    %v318 = vunpack.c.h.b16 %v206
    %v319 = vunpack.c.l.b16 %v207
    %v320 = vunpack.c.h.b16 %v207
    %v321 = vunpack.c.l.b16 %v208
    %v322 = vunpack.c.h.b16 %v208
    %v323 = vunpack.c.l.b16 %v209
    %v324 = vunpack.c.h.b16 %v209
    %v325 = vunpack.c.l.b16 %v210
    %v326 = vunpack.c.h.b16 %v210
    %v327 = vunpack.c.l.b16 %v211
    %v328 = vunpack.c.h.b16 %v211
    %v329 = vunpack.c.l.b16 %v212
    %v330 = vunpack.c.h.b16 %v212
    %v331 = vunpack.c.l.b16 %v213
    %v332 = vunpack.c.h.b16 %v213
    %v333 = vunpack.c.l.b16 %v214
    %v334 = vunpack.c.h.b16 %v214
    %v335 = vpack.c.b16 %v273, %v271
    %v336 = vpack.c.b16 %v274, %v272
    %v337 = vpack.c.b16 %v277, %v275
    %v338 = vpack.c.b16 %v278, %v276
    %v339 = vpack.c.b16 %v281, %v279
    %v340 = vpack.c.b16 %v282, %v280
    %v341 = vpack.c.b16 %v285, %v283
    %v342 = vpack.c.b16 %v286, %v284
    %v343 = vpack.c.b16 %v289, %v287
    %v344 = vpack.c.b16 %v290, %v288
    %v345 = vpack.c.b16 %v293, %v291
    %v346 = vpack.c.b16 %v294, %v292
    %v347 = vpack.c.b16 %v297, %v295
    %v348 = vpack.c.b16 %v298, %v296
    %v349 = vpack.c.b16 %v301, %v299
    %v350 = vpack.c.b16 %v302, %v300
    %v351 = vpack.c.b16 %v305, %v303
    %v352 = vpack.c.b16 %v306, %v304
    %v353 = vpack.c.b16 %v309, %v307
    %v354 = vpack.c.b16 %v310, %v308
    %v355 = vpack.c.b16 %v313, %v311
    %v356 = vpack.c.b16 %v314, %v312
    %v357 = vpack.c.b16 %v317, %v315
    %v358 = vpack.c.b16 %v318, %v316
    %v359 = vpack.c.b16 %v321, %v319
    %v360 = vpack.c.b16 %v322, %v320
    %v361 = vpack.c.b16 %v325, %v323
    %v362 = vpack.c.b16 %v326, %v324
    %v363 = vpack.c.b16 %v329, %v327
    %v364 = vpack.c.b16 %v330, %v328
    %v365 = vpack.c.b16 %v333, %v331
    %v366 = vpack.c.b16 %v334, %v332
    %399 = vmatprep.subr.bf16.mxu0 %v336
    %400 = vmatpush1.bf16.msra.mxu0 %v335
    %401 = vmatprep.subr.bf16.mxu0 %v338
    %402 = vmatpush1.bf16.msra.mxu0 %v337
    %403 = vmatprep.subr.bf16.mxu0 %v340
    %404 = vmatpush1.bf16.msra.mxu0 %v339
    %405 = vmatprep.subr.bf16.mxu0 %v342
    %406 = vmatpush1.bf16.msra.mxu0 %v341
    %407 = vmatprep.subr.bf16.mxu0 %v344
    %408 = vmatpush1.bf16.msra.mxu0 %v343
    %409 = vmatprep.subr.bf16.mxu0 %v346
    %410 = vmatpush1.bf16.msra.mxu0 %v345
    %411 = vmatprep.subr.bf16.mxu0 %v348
    %412 = vmatpush1.bf16.msra.mxu0 %v347
    %413 = vmatprep.subr.bf16.mxu0 %v350
    %414 = vmatpush1.bf16.msra.mxu0 %v349
    %415 = vmatprep.subr.bf16.mxu0 %v352
    %416 = vmatpush1.bf16.msra.mxu0 %v351
    %417 = vmatprep.subr.bf16.mxu0 %v354
    %418 = vmatpush1.bf16.msra.mxu0 %v353
    %419 = vmatprep.subr.bf16.mxu0 %v356
    %420 = vmatpush1.bf16.msra.mxu0 %v355
    %421 = vmatprep.subr.bf16.mxu0 %v358
    %422 = vmatpush1.bf16.msra.mxu0 %v357
    %423 = vmatprep.subr.bf16.mxu0 %v360
    %424 = vmatpush1.bf16.msra.mxu0 %v359
    %425 = vmatprep.subr.bf16.mxu0 %v362
    %426 = vmatpush1.bf16.msra.mxu0 %v361
    %427 = vmatprep.subr.bf16.mxu0 %v364
    %428 = vmatpush1.bf16.msra.mxu0 %v363
    %429 = vmatprep.subr.bf16.mxu0 %v366
    %430 = vmatpush1.bf16.msra.mxu0 %v365
    %431 = vmatprep.mubr.bf16.mxu0 %v236
    %432 = vmatmul.mubr.bf16.gmra.mrb[0].mxu0 %v229
    %v433 = vpop.f32.mrb[0].mxu0
    %v434 = vadd.f32 0.0, %v433
    %v435 = vpop.f32.mrb[0].mxu0
    %v436 = vadd.f32 0.0, %v435
    %v437 = vpop.f32.mrb[0].mxu0
    %v438 = vpop.f32.mrb[0].mxu0
    %439 = vdwg.mxu0
    %v440 = vpack.c.b16 %v217, %v217
    %v441 = vpack.c.b16 %v218, %v218
    %v476 = vunpack.c.l.b16 %v150
    %v477 = vunpack.c.h.b16 %v150
    %v478 = vunpack.c.l.b16 %v151
    %v479 = vunpack.c.h.b16 %v151
    %v480 = vunpack.c.l.b16 %v152
    %v481 = vunpack.c.h.b16 %v152
    %v482 = vunpack.c.l.b16 %v153
    %v483 = vunpack.c.h.b16 %v153
    %v484 = vunpack.c.l.b16 %v154
    %v485 = vunpack.c.h.b16 %v154
    %v486 = vunpack.c.l.b16 %v155
    %v487 = vunpack.c.h.b16 %v155
    %v488 = vunpack.c.l.b16 %v156
    %v489 = vunpack.c.h.b16 %v156
    %v490 = vunpack.c.l.b16 %v157
    %v491 = vunpack.c.h.b16 %v157
    %v492 = vunpack.c.l.b16 %v158
    %v493 = vunpack.c.h.b16 %v158
    %v494 = vunpack.c.l.b16 %v159
    %v495 = vunpack.c.h.b16 %v159
    %v496 = vunpack.c.l.b16 %v160
    %v497 = vunpack.c.h.b16 %v160
    %v498 = vunpack.c.l.b16 %v161
    %v499 = vunpack.c.h.b16 %v161
    %v500 = vunpack.c.l.b16 %v162
    %v501 = vunpack.c.h.b16 %v162
    %v502 = vunpack.c.l.b16 %v163
    %v503 = vunpack.c.h.b16 %v163
    %v504 = vunpack.c.l.b16 %v164
    %v505 = vunpack.c.h.b16 %v164
    %v506 = vunpack.c.l.b16 %v165
    %v507 = vunpack.c.h.b16 %v165
    %v508 = vunpack.c.l.b16 %v166
    %v509 = vunpack.c.h.b16 %v166
    %v510 = vunpack.c.l.b16 %v167
    %v511 = vunpack.c.h.b16 %v167
    %v512 = vunpack.c.l.b16 %v168
    %v513 = vunpack.c.h.b16 %v168
    %v514 = vunpack.c.l.b16 %v169
    %v515 = vunpack.c.h.b16 %v169
    %v516 = vunpack.c.l.b16 %v170
    %v517 = vunpack.c.h.b16 %v170
    %v518 = vunpack.c.l.b16 %v171
    %v519 = vunpack.c.h.b16 %v171
    %v520 = vunpack.c.l.b16 %v172
    %v521 = vunpack.c.h.b16 %v172
    %v522 = vunpack.c.l.b16 %v173
    %v523 = vunpack.c.h.b16 %v173
    %v524 = vunpack.c.l.b16 %v174
    %v525 = vunpack.c.h.b16 %v174
    %v526 = vunpack.c.l.b16 %v175
    %v527 = vunpack.c.h.b16 %v175
    %v528 = vunpack.c.l.b16 %v176
    %v529 = vunpack.c.h.b16 %v176
    %v530 = vunpack.c.l.b16 %v177
    %v531 = vunpack.c.h.b16 %v177
    %v532 = vunpack.c.l.b16 %v178
    %v533 = vunpack.c.h.b16 %v178
    %v534 = vunpack.c.l.b16 %v179
    %v535 = vunpack.c.h.b16 %v179
    %v536 = vunpack.c.l.b16 %v180
    %v537 = vunpack.c.h.b16 %v180
    %v538 = vunpack.c.l.b16 %v181
    %v539 = vunpack.c.h.b16 %v181
    %v540 = vpack.c.b16 %v478, %v476
    %v541 = vpack.c.b16 %v479, %v477
    %v542 = vpack.c.b16 %v482, %v480
    %v543 = vpack.c.b16 %v483, %v481
    %v544 = vpack.c.b16 %v486, %v484
    %v545 = vpack.c.b16 %v487, %v485
    %v546 = vpack.c.b16 %v490, %v488
    %v547 = vpack.c.b16 %v491, %v489
    %v548 = vpack.c.b16 %v494, %v492
    %v549 = vpack.c.b16 %v495, %v493
    %v550 = vpack.c.b16 %v498, %v496
    %v551 = vpack.c.b16 %v499, %v497
    %v552 = vpack.c.b16 %v502, %v500
    %v553 = vpack.c.b16 %v503, %v501
    %v554 = vpack.c.b16 %v506, %v504
    %v555 = vpack.c.b16 %v507, %v505
    %v556 = vpack.c.b16 %v510, %v508
    %v557 = vpack.c.b16 %v511, %v509
    %v558 = vpack.c.b16 %v514, %v512
    %v559 = vpack.c.b16 %v515, %v513
    %v560 = vpack.c.b16 %v518, %v516
    %v561 = vpack.c.b16 %v519, %v517
    %v562 = vpack.c.b16 %v522, %v520
    %v563 = vpack.c.b16 %v523, %v521
    %v564 = vpack.c.b16 %v526, %v524
    %v565 = vpack.c.b16 %v527, %v525
    %v566 = vpack.c.b16 %v530, %v528
    %v567 = vpack.c.b16 %v531, %v529
    %v568 = vpack.c.b16 %v534, %v532
    %v569 = vpack.c.b16 %v535, %v533
    %v570 = vpack.c.b16 %v538, %v536
    %v571 = vpack.c.b16 %v539, %v537
    %604 = vmatprep.subr.bf16.mxu0 %v541
    %605 = vmatpush1.bf16.msra.mxu0 %v540
    %606 = vmatprep.subr.bf16.mxu0 %v543
    %607 = vmatpush1.bf16.msra.mxu0 %v542
    %608 = vmatprep.subr.bf16.mxu0 %v545
    %609 = vmatpush1.bf16.msra.mxu0 %v544
    %610 = vmatprep.subr.bf16.mxu0 %v547
    %611 = vmatpush1.bf16.msra.mxu0 %v546
    %612 = vmatprep.subr.bf16.mxu0 %v549
    %613 = vmatpush1.bf16.msra.mxu0 %v548
    %614 = vmatprep.subr.bf16.mxu0 %v551
    %615 = vmatpush1.bf16.msra.mxu0 %v550
    %616 = vmatprep.subr.bf16.mxu0 %v553
    %617 = vmatpush1.bf16.msra.mxu0 %v552
    %618 = vmatprep.subr.bf16.mxu0 %v555
    %619 = vmatpush1.bf16.msra.mxu0 %v554
    %620 = vmatprep.subr.bf16.mxu0 %v557
    %621 = vmatpush1.bf16.msra.mxu0 %v556
    %622 = vmatprep.subr.bf16.mxu0 %v559
    %623 = vmatpush1.bf16.msra.mxu0 %v558
    %624 = vmatprep.subr.bf16.mxu0 %v561
    %625 = vmatpush1.bf16.msra.mxu0 %v560
    %626 = vmatprep.subr.bf16.mxu0 %v563
    %627 = vmatpush1.bf16.msra.mxu0 %v562
    %628 = vmatprep.subr.bf16.mxu0 %v565
    %629 = vmatpush1.bf16.msra.mxu0 %v564
    %630 = vmatprep.subr.bf16.mxu0 %v567
    %631 = vmatpush1.bf16.msra.mxu0 %v566
    %632 = vmatprep.subr.bf16.mxu0 %v569
    %633 = vmatpush1.bf16.msra.mxu0 %v568
    %634 = vmatprep.subr.bf16.mxu0 %v571
    %635 = vmatpush1.bf16.msra.mxu0 %v570
    %636 = vmatprep.mubr.bf16.mxu0 %v441
    %637 = vmatmul.mubr.bf16.gmra.mrb[0].mxu0 %v440
    %v638 = vpop.f32.mrb[0].mxu0
    %v639 = vadd.f32 %v434, %v638
    %v640 = vpop.f32.mrb[0].mxu0
    %v641 = vadd.f32 %v436, %v640
    %v642 = vpop.f32.mrb[0].mxu0
    %v643 = vpop.f32.mrb[0].mxu0
    %644 = vdwg.mxu0
    %s645 = scalar_lea.vmem [#allocation6], 512
    %v646 = vld [vmem:[%s645] sm:$0xff]
    %v647 = vld [vmem:[%s645 + $0x8] sm:$0xff]
    %v648 = vld [vmem:[%s645 + $0x10] sm:$0xff]
    %v649 = vld [vmem:[%s645 + $0x18] sm:$0xff]
    %v650 = vld [vmem:[%s645 + $0x20] sm:$0xff]
    %v651 = vld [vmem:[%s645 + $0x28] sm:$0xff]
    %v652 = vld [vmem:[%s645 + $0x30] sm:$0xff]
    %v653 = vld [vmem:[%s645 + $0x38] sm:$0xff]
    %v654 = vld [vmem:[%s645 + $0x40] sm:$0xff]
    %v655 = vld [vmem:[%s645 + $0x48] sm:$0xff]
    %v656 = vld [vmem:[%s645 + $0x50] sm:$0xff]
    %v657 = vld [vmem:[%s645 + $0x58] sm:$0xff]
    %v658 = vld [vmem:[%s645 + $0x60] sm:$0xff]
    %v659 = vld [vmem:[%s645 + $0x68] sm:$0xff]
    %v660 = vld [vmem:[%s645 + $0x70] sm:$0xff]
    %v661 = vld [vmem:[%s645 + $0x78] sm:$0xff]
    %v662 = vld [vmem:[%s645 + $0x80] sm:$0xff]
    %v663 = vld [vmem:[%s645 + $0x88] sm:$0xff]
    %v664 = vld [vmem:[%s645 + $0x90] sm:$0xff]
    %v665 = vld [vmem:[%s645 + $0x98] sm:$0xff]
    %v666 = vld [vmem:[%s645 + $0xa0] sm:$0xff]
    %v667 = vld [vmem:[%s645 + $0xa8] sm:$0xff]
    %v668 = vld [vmem:[%s645 + $0xb0] sm:$0xff]
    %v669 = vld [vmem:[%s645 + $0xb8] sm:$0xff]
    %v670 = vld [vmem:[%s645 + $0xc0] sm:$0xff]
    %v671 = vld [vmem:[%s645 + $0xc8] sm:$0xff]
    %v672 = vld [vmem:[%s645 + $0xd0] sm:$0xff]
    %v673 = vld [vmem:[%s645 + $0xd8] sm:$0xff]
    %v674 = vld [vmem:[%s645 + $0xe0] sm:$0xff]
    %v675 = vld [vmem:[%s645 + $0xe8] sm:$0xff]
    %v676 = vld [vmem:[%s645 + $0xf0] sm:$0xff]
    %v677 = vld [vmem:[%s645 + $0xf8] sm:$0xff]
    %v679 = vunpack.c.l.b16 %v149
    %v680 = vunpack.c.h.b16 %v149
    %v681 = vpack.c.b16 %v219, %v679
    %v682 = vpack.c.b16 %v220, %v680
    %v683 = vrot.slane %v681, 1
    %v684 = vrot.slane %v682, 1
    %v719 = vunpack.c.l.b16 %v646
    %v720 = vunpack.c.h.b16 %v646
    %v721 = vunpack.c.l.b16 %v647
    %v722 = vunpack.c.h.b16 %v647
    %v723 = vunpack.c.l.b16 %v648
    %v724 = vunpack.c.h.b16 %v648
    %v725 = vunpack.c.l.b16 %v649
    %v726 = vunpack.c.h.b16 %v649
    %v727 = vunpack.c.l.b16 %v650
    %v728 = vunpack.c.h.b16 %v650
    %v729 = vunpack.c.l.b16 %v651
    %v730 = vunpack.c.h.b16 %v651
    %v731 = vunpack.c.l.b16 %v652
    %v732 = vunpack.c.h.b16 %v652
    %v733 = vunpack.c.l.b16 %v653
    %v734 = vunpack.c.h.b16 %v653
    %v735 = vunpack.c.l.b16 %v654
    %v736 = vunpack.c.h.b16 %v654
    %v737 = vunpack.c.l.b16 %v655
    %v738 = vunpack.c.h.b16 %v655
    %v739 = vunpack.c.l.b16 %v656
    %v740 = vunpack.c.h.b16 %v656
    %v741 = vunpack.c.l.b16 %v657
    %v742 = vunpack.c.h.b16 %v657
    %v743 = vunpack.c.l.b16 %v658
    %v744 = vunpack.c.h.b16 %v658
    %v745 = vunpack.c.l.b16 %v659
    %v746 = vunpack.c.h.b16 %v659
    %v747 = vunpack.c.l.b16 %v660
    %v748 = vunpack.c.h.b16 %v660
    %v749 = vunpack.c.l.b16 %v661
    %v750 = vunpack.c.h.b16 %v661
    %v751 = vunpack.c.l.b16 %v662
    %v752 = vunpack.c.h.b16 %v662
    %v753 = vunpack.c.l.b16 %v663
    %v754 = vunpack.c.h.b16 %v663
    %v755 = vunpack.c.l.b16 %v664
    %v756 = vunpack.c.h.b16 %v664
    %v757 = vunpack.c.l.b16 %v665
    %v758 = vunpack.c.h.b16 %v665
    %v759 = vunpack.c.l.b16 %v666
    %v760 = vunpack.c.h.b16 %v666
    %v761 = vunpack.c.l.b16 %v667
    %v762 = vunpack.c.h.b16 %v667
    %v763 = vunpack.c.l.b16 %v668
    %v764 = vunpack.c.h.b16 %v668
    %v765 = vunpack.c.l.b16 %v669
    %v766 = vunpack.c.h.b16 %v669
    %v767 = vunpack.c.l.b16 %v670
    %v768 = vunpack.c.h.b16 %v670
    %v769 = vunpack.c.l.b16 %v671
    %v770 = vunpack.c.h.b16 %v671
    %v771 = vunpack.c.l.b16 %v672
    %v772 = vunpack.c.h.b16 %v672
    %v773 = vunpack.c.l.b16 %v673
    %v774 = vunpack.c.h.b16 %v673
    %v775 = vunpack.c.l.b16 %v674
    %v776 = vunpack.c.h.b16 %v674
    %v777 = vunpack.c.l.b16 %v675
    %v778 = vunpack.c.h.b16 %v675
    %v779 = vunpack.c.l.b16 %v676
    %v780 = vunpack.c.h.b16 %v676
    %v781 = vunpack.c.l.b16 %v677
    %v782 = vunpack.c.h.b16 %v677
    %v783 = vpack.c.b16 %v721, %v719
    %v784 = vpack.c.b16 %v722, %v720
    %v785 = vpack.c.b16 %v725, %v723
    %v786 = vpack.c.b16 %v726, %v724
    %v787 = vpack.c.b16 %v729, %v727
    %v788 = vpack.c.b16 %v730, %v728
    %v789 = vpack.c.b16 %v733, %v731
    %v790 = vpack.c.b16 %v734, %v732
    %v791 = vpack.c.b16 %v737, %v735
    %v792 = vpack.c.b16 %v738, %v736
    %v793 = vpack.c.b16 %v741, %v739
    %v794 = vpack.c.b16 %v742, %v740
    %v795 = vpack.c.b16 %v745, %v743
    %v796 = vpack.c.b16 %v746, %v744
    %v797 = vpack.c.b16 %v749, %v747
    %v798 = vpack.c.b16 %v750, %v748
    %v799 = vpack.c.b16 %v753, %v751
    %v800 = vpack.c.b16 %v754, %v752
    %v801 = vpack.c.b16 %v757, %v755
    %v802 = vpack.c.b16 %v758, %v756
    %v803 = vpack.c.b16 %v761, %v759
    %v804 = vpack.c.b16 %v762, %v760
    %v805 = vpack.c.b16 %v765, %v763
    %v806 = vpack.c.b16 %v766, %v764
    %v807 = vpack.c.b16 %v769, %v767
    %v808 = vpack.c.b16 %v770, %v768
    %v809 = vpack.c.b16 %v773, %v771
    %v810 = vpack.c.b16 %v774, %v772
    %v811 = vpack.c.b16 %v777, %v775
    %v812 = vpack.c.b16 %v778, %v776
    %v813 = vpack.c.b16 %v781, %v779
    %v814 = vpack.c.b16 %v782, %v780
    %847 = vmatprep.subr.bf16.mxu0 %v784
    %848 = vmatpush1.bf16.msra.mxu0 %v783
    %849 = vmatprep.subr.bf16.mxu0 %v786
    %850 = vmatpush1.bf16.msra.mxu0 %v785
    %851 = vmatprep.subr.bf16.mxu0 %v788
    %852 = vmatpush1.bf16.msra.mxu0 %v787
    %853 = vmatprep.subr.bf16.mxu0 %v790
    %854 = vmatpush1.bf16.msra.mxu0 %v789
    %855 = vmatprep.subr.bf16.mxu0 %v792
    %856 = vmatpush1.bf16.msra.mxu0 %v791
    %857 = vmatprep.subr.bf16.mxu0 %v794
    %858 = vmatpush1.bf16.msra.mxu0 %v793
    %859 = vmatprep.subr.bf16.mxu0 %v796
    %860 = vmatpush1.bf16.msra.mxu0 %v795
    %861 = vmatprep.subr.bf16.mxu0 %v798
    %862 = vmatpush1.bf16.msra.mxu0 %v797
    %863 = vmatprep.subr.bf16.mxu0 %v800
    %864 = vmatpush1.bf16.msra.mxu0 %v799
    %865 = vmatprep.subr.bf16.mxu0 %v802
    %866 = vmatpush1.bf16.msra.mxu0 %v801
    %867 = vmatprep.subr.bf16.mxu0 %v804
    %868 = vmatpush1.bf16.msra.mxu0 %v803
    %869 = vmatprep.subr.bf16.mxu0 %v806
    %870 = vmatpush1.bf16.msra.mxu0 %v805
    %871 = vmatprep.subr.bf16.mxu0 %v808
    %872 = vmatpush1.bf16.msra.mxu0 %v807
    %873 = vmatprep.subr.bf16.mxu0 %v810
    %874 = vmatpush1.bf16.msra.mxu0 %v809
    %875 = vmatprep.subr.bf16.mxu0 %v812
    %876 = vmatpush1.bf16.msra.mxu0 %v811
    %877 = vmatprep.subr.bf16.mxu0 %v814
    %878 = vmatpush1.bf16.msra.mxu0 %v813
    %879 = vmatprep.mubr.bf16.mxu0 %v684
    %880 = vmatmul.mubr.bf16.gmra.mrb[0].mxu0 %v683
    %v881 = vpop.f32.mrb[0].mxu0
    %v882 = vadd.f32 0.0, %v881
    %v883 = vpop.f32.mrb[0].mxu0
    %v884 = vadd.f32 0.0, %v883
    %v885 = vpop.f32.mrb[0].mxu0
    %v886 = vpop.f32.mrb[0].mxu0
    %887 = vdwg.mxu0
    %v888 = vadd.f32 %v639, %v882
    %v889 = vadd.f32 %v641, %v884
    %v890 = vld [vmem:[%s140] sm:$0xff]
    %v891 = vld [vmem:[%s140 + $0x8] sm:$0x11]
    %v892 = vld [vmem:[%s140] sm:$0xee]
    %v895 = vunpack.c.l.b16 %v890
    %v896 = vunpack.c.h.b16 %v890
    %v897 = vunpack.c.l.b16 %v891
    %v898 = vunpack.c.h.b16 %v891
    %v899 = vpack.c.b16 %v897, %v895
    %v900 = vpack.c.b16 %v898, %v896
    %v902 = vshrl.u32 %v899, 16
    %v904 = vshll.u32 %v899, 16
    %v906 = vrot.slane %v904, 1
    %v907 = vor.u32 %v902, %v906
    %v909 = vshrl.u32 %v900, 16
    %v911 = vshll.u32 %v900, 16
    %v913 = vrot.slane %v911, 1
    %v914 = vor.u32 %v909, %v913
    %917 = vmatprep.subr.bf16.mxu0 %v336
    %918 = vmatpush1.bf16.msra.mxu0 %v335
    %919 = vmatprep.subr.bf16.mxu0 %v338
    %920 = vmatpush1.bf16.msra.mxu0 %v337
    %921 = vmatprep.subr.bf16.mxu0 %v340
    %922 = vmatpush1.bf16.msra.mxu0 %v339
    %923 = vmatprep.subr.bf16.mxu0 %v342
    %924 = vmatpush1.bf16.msra.mxu0 %v341
    %925 = vmatprep.subr.bf16.mxu0 %v344
    %926 = vmatpush1.bf16.msra.mxu0 %v343
    %927 = vmatprep.subr.bf16.mxu0 %v346
    %928 = vmatpush1.bf16.msra.mxu0 %v345
    %929 = vmatprep.subr.bf16.mxu0 %v348
    %930 = vmatpush1.bf16.msra.mxu0 %v347
    %931 = vmatprep.subr.bf16.mxu0 %v350
    %932 = vmatpush1.bf16.msra.mxu0 %v349
    %933 = vmatprep.subr.bf16.mxu0 %v352
    %934 = vmatpush1.bf16.msra.mxu0 %v351
    %935 = vmatprep.subr.bf16.mxu0 %v354
    %936 = vmatpush1.bf16.msra.mxu0 %v353
    %937 = vmatprep.subr.bf16.mxu0 %v356
    %938 = vmatpush1.bf16.msra.mxu0 %v355
    %939 = vmatprep.subr.bf16.mxu0 %v358
    %940 = vmatpush1.bf16.msra.mxu0 %v357
    %941 = vmatprep.subr.bf16.mxu0 %v360
    %942 = vmatpush1.bf16.msra.mxu0 %v359
    %943 = vmatprep.subr.bf16.mxu0 %v362
    %944 = vmatpush1.bf16.msra.mxu0 %v361
    %945 = vmatprep.subr.bf16.mxu0 %v364
    %946 = vmatpush1.bf16.msra.mxu0 %v363
    %947 = vmatprep.subr.bf16.mxu0 %v366
    %948 = vmatpush1.bf16.msra.mxu0 %v365
    %949 = vmatprep.mubr.bf16.mxu0 %v914
    %950 = vmatmul.mubr.bf16.gmra.mrb[0].mxu0 %v907
    %v951 = vpop.f32.mrb[0].mxu0
    %v952 = vadd.f32 0.0, %v951
    %v953 = vpop.f32.mrb[0].mxu0
    %v954 = vadd.f32 0.0, %v953
    %v955 = vpop.f32.mrb[0].mxu0
    %v956 = vpop.f32.mrb[0].mxu0
    %957 = vdwg.mxu0
    %v958 = vpack.c.b16 %v895, %v895
    %v959 = vpack.c.b16 %v896, %v896
    %962 = vmatprep.subr.bf16.mxu0 %v541
    %963 = vmatpush1.bf16.msra.mxu0 %v540
    %964 = vmatprep.subr.bf16.mxu0 %v543
    %965 = vmatpush1.bf16.msra.mxu0 %v542
    %966 = vmatprep.subr.bf16.mxu0 %v545
    %967 = vmatpush1.bf16.msra.mxu0 %v544
    %968 = vmatprep.subr.bf16.mxu0 %v547
    %969 = vmatpush1.bf16.msra.mxu0 %v546
    %970 = vmatprep.subr.bf16.mxu0 %v549
    %971 = vmatpush1.bf16.msra.mxu0 %v548
    %972 = vmatprep.subr.bf16.mxu0 %v551
    %973 = vmatpush1.bf16.msra.mxu0 %v550
    %974 = vmatprep.subr.bf16.mxu0 %v553
    %975 = vmatpush1.bf16.msra.mxu0 %v552
    %976 = vmatprep.subr.bf16.mxu0 %v555
    %977 = vmatpush1.bf16.msra.mxu0 %v554
    %978 = vmatprep.subr.bf16.mxu0 %v557
    %979 = vmatpush1.bf16.msra.mxu0 %v556
    %980 = vmatprep.subr.bf16.mxu0 %v559
    %981 = vmatpush1.bf16.msra.mxu0 %v558
    %982 = vmatprep.subr.bf16.mxu0 %v561
    %983 = vmatpush1.bf16.msra.mxu0 %v560
    %984 = vmatprep.subr.bf16.mxu0 %v563
    %985 = vmatpush1.bf16.msra.mxu0 %v562
    %986 = vmatprep.subr.bf16.mxu0 %v565
    %987 = vmatpush1.bf16.msra.mxu0 %v564
    %988 = vmatprep.subr.bf16.mxu0 %v567
    %989 = vmatpush1.bf16.msra.mxu0 %v566
    %990 = vmatprep.subr.bf16.mxu0 %v569
    %991 = vmatpush1.bf16.msra.mxu0 %v568
    %992 = vmatprep.subr.bf16.mxu0 %v571
    %993 = vmatpush1.bf16.msra.mxu0 %v570
    %994 = vmatprep.mubr.bf16.mxu0 %v959
    %995 = vmatmul.mubr.bf16.gmra.mrb[0].mxu0 %v958
    %v996 = vpop.f32.mrb[0].mxu0
    %v997 = vadd.f32 %v952, %v996
    %v998 = vpop.f32.mrb[0].mxu0
    %v999 = vadd.f32 %v954, %v998
    %v1000 = vpop.f32.mrb[0].mxu0
    %v1001 = vpop.f32.mrb[0].mxu0
    %1002 = vdwg.mxu0
    %v1004 = vunpack.c.l.b16 %v892
    %v1005 = vunpack.c.h.b16 %v892
    %v1006 = vpack.c.b16 %v897, %v1004
    %v1007 = vpack.c.b16 %v898, %v1005
    %v1008 = vrot.slane %v1006, 1
    %v1009 = vrot.slane %v1007, 1
    %1012 = vmatprep.subr.bf16.mxu0 %v784
    %1013 = vmatpush1.bf16.msra.mxu0 %v783
    %1014 = vmatprep.subr.bf16.mxu0 %v786
    %1015 = vmatpush1.bf16.msra.mxu0 %v785
    %1016 = vmatprep.subr.bf16.mxu0 %v788
    %1017 = vmatpush1.bf16.msra.mxu0 %v787
    %1018 = vmatprep.subr.bf16.mxu0 %v790
    %1019 = vmatpush1.bf16.msra.mxu0 %v789
    %1020 = vmatprep.subr.bf16.mxu0 %v792
    %1021 = vmatpush1.bf16.msra.mxu0 %v791
    %1022 = vmatprep.subr.bf16.mxu0 %v794
    %1023 = vmatpush1.bf16.msra.mxu0 %v793
    %1024 = vmatprep.subr.bf16.mxu0 %v796
    %1025 = vmatpush1.bf16.msra.mxu0 %v795
    %1026 = vmatprep.subr.bf16.mxu0 %v798
    %1027 = vmatpush1.bf16.msra.mxu0 %v797
    %1028 = vmatprep.subr.bf16.mxu0 %v800
    %1029 = vmatpush1.bf16.msra.mxu0 %v799
    %1030 = vmatprep.subr.bf16.mxu0 %v802
    %1031 = vmatpush1.bf16.msra.mxu0 %v801
    %1032 = vmatprep.subr.bf16.mxu0 %v804
    %1033 = vmatpush1.bf16.msra.mxu0 %v803
    %1034 = vmatprep.subr.bf16.mxu0 %v806
    %1035 = vmatpush1.bf16.msra.mxu0 %v805
    %1036 = vmatprep.subr.bf16.mxu0 %v808
    %1037 = vmatpush1.bf16.msra.mxu0 %v807
    %1038 = vmatprep.subr.bf16.mxu0 %v810
    %1039 = vmatpush1.bf16.msra.mxu0 %v809
    %1040 = vmatprep.subr.bf16.mxu0 %v812
    %1041 = vmatpush1.bf16.msra.mxu0 %v811
    %1042 = vmatprep.subr.bf16.mxu0 %v814
    %1043 = vmatpush1.bf16.msra.mxu0 %v813
    %1044 = vmatprep.mubr.bf16.mxu0 %v1009
    %1045 = vmatmul.mubr.bf16.gmra.mrb[0].mxu0 %v1008
    %v1046 = vpop.f32.mrb[0].mxu0
    %v1047 = vadd.f32 0.0, %v1046
    %v1048 = vpop.f32.mrb[0].mxu0
    %v1049 = vadd.f32 0.0, %v1048
    %v1050 = vpop.f32.mrb[0].mxu0
    %v1051 = vpop.f32.mrb[0].mxu0
    %1052 = vdwg.mxu0
    %v1053 = vadd.f32 %v997, %v1047
    %v1054 = vadd.f32 %v999, %v1049
    %v1056 = vlaneseq
    %v1057 = vshrl.u32 %v1056, 7
    %v1058 = vsub.s32 0, %v1057
    %v1059 = vrot.slane %v94, %v1058
    %v1060 = vlaneseq
    %v1061 = vshrl.u32 %v1060, 7
    %v1062 = vsub.s32 2, %v1061
    %v1063 = vrot.slane %v94, %v1062
    %v1066 = vlaneseq
    %v1067 = vshrl.u32 %v1066, 7
    %v1068 = vsub.s32 0, %v1067
    %v1069 = vrot.slane %v1059, %v1068
    %v1070 = vlaneseq
    %v1071 = vshrl.u32 %v1070, 7
    %v1072 = vsub.s32 0, %v1071
    %v1073 = vrot.slane %v1063, %v1072
    %v1074 = vadd.f32 %v888, %v1069
    %v1075 = vadd.f32 %v889, %v1073
    %v1076 = vadd.f32 %v1053, %v1069
    %v1077 = vadd.f32 %v1054, %v1073
    %v1078 = vmax.f32 %v1074, 0.0
    %v1079 = vmax.f32 %v1075, 0.0
    %v1080 = vmax.f32 %v1076, 0.0
    %v1081 = vmax.f32 %v1077, 0.0
    %v1082 = vpack.c.bf16 %v1078, %v1078
    %v1083 = vpack.c.bf16 %v1079, %v1079
    %v1084 = vpack.c.bf16 %v1080, %v1080
    %v1085 = vpack.c.bf16 %v1081, %v1081
    %v1088 = vunpack.c.l.b16 %v1082
    %v1089 = vunpack.c.l.b16 %v1083
    %v1090 = vpack.c.b16 %v1089, %v1088
    %v1092 = vshrl.u32 %v1090, 16
    %v1094 = vrot.slane %v1092, 7
    %v1095 = vshll.u32 %v1090, 16
    %v1097 = vor.u32 %v1094, %v1095
    %v1098 = vrot.slane %v1094, 4
    %v1101 = vsel %vm118, %v1097, %v147
    %1102 = vst [vmem:[#allocation2] sm:$0xff] %v1101
    %v1103 = vld [vmem:[#allocation2 + $0x8] sm:$0x11]
    %v1104 = vsel %vm72, %v1098, %v1103
    %1105 = vst [vmem:[#allocation2 + $0x8] sm:$0x11] %v1104
    %v1108 = vunpack.c.l.b16 %v1084
    %v1109 = vunpack.c.l.b16 %v1085
    %v1110 = vpack.c.b16 %v1109, %v1108
    %v1112 = vshrl.u32 %v1110, 16
    %v1114 = vrot.slane %v1112, 7
    %v1115 = vshll.u32 %v1110, 16
    %v1117 = vor.u32 %v1114, %v1115
    %v1118 = vrot.slane %v1114, 4
    %v1121 = vld [vmem:[%s140] sm:$0xff]
    %v1122 = vsel %vm118, %v1117, %v1121
    %1123 = vst [vmem:[%s140] sm:$0xff] %v1122
    %v1124 = vld [vmem:[%s140 + $0x8] sm:$0x11]
    %v1125 = vsel %vm72, %v1118, %v1124
    %1126 = vst [vmem:[%s140 + $0x8] sm:$0x11] %v1125
    %v1127 = vld [vmem:[#allocation2] sm:$0xff]
    %v1128 = vld [vmem:[#allocation2 + $0x8] sm:$0x11]
    %v1129 = vld [vmem:[#allocation2] sm:$0xee]
    %v1130 = vld [vmem:[#allocation8] sm:$0xff]
    %v1131 = vld [vmem:[#allocation8 + $0x8] sm:$0xff]
    %v1132 = vld [vmem:[#allocation8 + $0x10] sm:$0xff]
    %v1133 = vld [vmem:[#allocation8 + $0x18] sm:$0xff]
    %v1134 = vld [vmem:[#allocation8 + $0x20] sm:$0xff]
    %v1135 = vld [vmem:[#allocation8 + $0x28] sm:$0xff]
    %v1136 = vld [vmem:[#allocation8 + $0x30] sm:$0xff]
    %v1137 = vld [vmem:[#allocation8 + $0x38] sm:$0xff]
    %v1138 = vld [vmem:[#allocation8 + $0x40] sm:$0xff]
    %v1139 = vld [vmem:[#allocation8 + $0x48] sm:$0xff]
    %v1140 = vld [vmem:[#allocation8 + $0x50] sm:$0xff]
    %v1141 = vld [vmem:[#allocation8 + $0x58] sm:$0xff]
    %v1142 = vld [vmem:[#allocation8 + $0x60] sm:$0xff]
    %v1143 = vld [vmem:[#allocation8 + $0x68] sm:$0xff]
    %v1144 = vld [vmem:[#allocation8 + $0x70] sm:$0xff]
    %v1145 = vld [vmem:[#allocation8 + $0x78] sm:$0xff]
    %v1146 = vld [vmem:[#allocation8 + $0x80] sm:$0xff]
    %v1147 = vld [vmem:[#allocation8 + $0x88] sm:$0xff]
    %v1148 = vld [vmem:[#allocation8 + $0x90] sm:$0xff]
    %v1149 = vld [vmem:[#allocation8 + $0x98] sm:$0xff]
    %v1150 = vld [vmem:[#allocation8 + $0xa0] sm:$0xff]
    %v1151 = vld [vmem:[#allocation8 + $0xa8] sm:$0xff]
    %v1152 = vld [vmem:[#allocation8 + $0xb0] sm:$0xff]
    %v1153 = vld [vmem:[#allocation8 + $0xb8] sm:$0xff]
    %v1154 = vld [vmem:[#allocation8 + $0xc0] sm:$0xff]
    %v1155 = vld [vmem:[#allocation8 + $0xc8] sm:$0xff]
    %v1156 = vld [vmem:[#allocation8 + $0xd0] sm:$0xff]
    %v1157 = vld [vmem:[#allocation8 + $0xd8] sm:$0xff]
    %v1158 = vld [vmem:[#allocation8 + $0xe0] sm:$0xff]
    %v1159 = vld [vmem:[#allocation8 + $0xe8] sm:$0xff]
    %v1160 = vld [vmem:[#allocation8 + $0xf0] sm:$0xff]
    %v1161 = vld [vmem:[#allocation8 + $0xf8] sm:$0xff]
    %s1162 = scalar_lea.vmem [#allocation8], 256
    %v1163 = vld [vmem:[%s1162] sm:$0xff]
    %v1164 = vld [vmem:[%s1162 + $0x8] sm:$0xff]
    %v1165 = vld [vmem:[%s1162 + $0x10] sm:$0xff]
    %v1166 = vld [vmem:[%s1162 + $0x18] sm:$0xff]
    %v1167 = vld [vmem:[%s1162 + $0x20] sm:$0xff]
    %v1168 = vld [vmem:[%s1162 + $0x28] sm:$0xff]
    %v1169 = vld [vmem:[%s1162 + $0x30] sm:$0xff]
    %v1170 = vld [vmem:[%s1162 + $0x38] sm:$0xff]
    %v1171 = vld [vmem:[%s1162 + $0x40] sm:$0xff]
    %v1172 = vld [vmem:[%s1162 + $0x48] sm:$0xff]
    %v1173 = vld [vmem:[%s1162 + $0x50] sm:$0xff]
    %v1174 = vld [vmem:[%s1162 + $0x58] sm:$0xff]
    %v1175 = vld [vmem:[%s1162 + $0x60] sm:$0xff]
    %v1176 = vld [vmem:[%s1162 + $0x68] sm:$0xff]
    %v1177 = vld [vmem:[%s1162 + $0x70] sm:$0xff]
    %v1178 = vld [vmem:[%s1162 + $0x78] sm:$0xff]
    %v1179 = vld [vmem:[%s1162 + $0x80] sm:$0xff]
    %v1180 = vld [vmem:[%s1162 + $0x88] sm:$0xff]
    %v1181 = vld [vmem:[%s1162 + $0x90] sm:$0xff]
    %v1182 = vld [vmem:[%s1162 + $0x98] sm:$0xff]
    %v1183 = vld [vmem:[%s1162 + $0xa0] sm:$0xff]
    %v1184 = vld [vmem:[%s1162 + $0xa8] sm:$0xff]
    %v1185 = vld [vmem:[%s1162 + $0xb0] sm:$0xff]
    %v1186 = vld [vmem:[%s1162 + $0xb8] sm:$0xff]
    %v1187 = vld [vmem:[%s1162 + $0xc0] sm:$0xff]
    %v1188 = vld [vmem:[%s1162 + $0xc8] sm:$0xff]
    %v1189 = vld [vmem:[%s1162 + $0xd0] sm:$0xff]
    %v1190 = vld [vmem:[%s1162 + $0xd8] sm:$0xff]
    %v1191 = vld [vmem:[%s1162 + $0xe0] sm:$0xff]
    %v1192 = vld [vmem:[%s1162 + $0xe8] sm:$0xff]
    %v1193 = vld [vmem:[%s1162 + $0xf0] sm:$0xff]
    %v1194 = vld [vmem:[%s1162 + $0xf8] sm:$0xff]
    %v1197 = vunpack.c.l.b16 %v1127
    %v1198 = vunpack.c.h.b16 %v1127
    %v1199 = vunpack.c.l.b16 %v1128
    %v1200 = vunpack.c.h.b16 %v1128
    %v1201 = vpack.c.b16 %v1199, %v1197
    %v1202 = vpack.c.b16 %v1200, %v1198
    %v1204 = vshrl.u32 %v1201, 16
    %v1206 = vshll.u32 %v1201, 16
    %v1208 = vrot.slane %v1206, 1
    %v1209 = vor.u32 %v1204, %v1208
    %v1211 = vshrl.u32 %v1202, 16
    %v1213 = vshll.u32 %v1202, 16
    %v1215 = vrot.slane %v1213, 1
    %v1216 = vor.u32 %v1211, %v1215
    %v1251 = vunpack.c.l.b16 %v1163
    %v1252 = vunpack.c.h.b16 %v1163
    %v1253 = vunpack.c.l.b16 %v1164
    %v1254 = vunpack.c.h.b16 %v1164
    %v1255 = vunpack.c.l.b16 %v1165
    %v1256 = vunpack.c.h.b16 %v1165
    %v1257 = vunpack.c.l.b16 %v1166
    %v1258 = vunpack.c.h.b16 %v1166
    %v1259 = vunpack.c.l.b16 %v1167
    %v1260 = vunpack.c.h.b16 %v1167
    %v1261 = vunpack.c.l.b16 %v1168
    %v1262 = vunpack.c.h.b16 %v1168
    %v1263 = vunpack.c.l.b16 %v1169
    %v1264 = vunpack.c.h.b16 %v1169
    %v1265 = vunpack.c.l.b16 %v1170
    %v1266 = vunpack.c.h.b16 %v1170
    %v1267 = vunpack.c.l.b16 %v1171
    %v1268 = vunpack.c.h.b16 %v1171
    %v1269 = vunpack.c.l.b16 %v1172
    %v1270 = vunpack.c.h.b16 %v1172
    %v1271 = vunpack.c.l.b16 %v1173
    %v1272 = vunpack.c.h.b16 %v1173
    %v1273 = vunpack.c.l.b16 %v1174
    %v1274 = vunpack.c.h.b16 %v1174
    %v1275 = vunpack.c.l.b16 %v1175
    %v1276 = vunpack.c.h.b16 %v1175
    %v1277 = vunpack.c.l.b16 %v1176
    %v1278 = vunpack.c.h.b16 %v1176
    %v1279 = vunpack.c.l.b16 %v1177
    %v1280 = vunpack.c.h.b16 %v1177
    %v1281 = vunpack.c.l.b16 %v1178
    %v1282 = vunpack.c.h.b16 %v1178
    %v1283 = vunpack.c.l.b16 %v1179
    %v1284 = vunpack.c.h.b16 %v1179
    %v1285 = vunpack.c.l.b16 %v1180
    %v1286 = vunpack.c.h.b16 %v1180
    %v1287 = vunpack.c.l.b16 %v1181
    %v1288 = vunpack.c.h.b16 %v1181
    %v1289 = vunpack.c.l.b16 %v1182
    %v1290 = vunpack.c.h.b16 %v1182
    %v1291 = vunpack.c.l.b16 %v1183
    %v1292 = vunpack.c.h.b16 %v1183
    %v1293 = vunpack.c.l.b16 %v1184
    %v1294 = vunpack.c.h.b16 %v1184
    %v1295 = vunpack.c.l.b16 %v1185
    %v1296 = vunpack.c.h.b16 %v1185
    %v1297 = vunpack.c.l.b16 %v1186
    %v1298 = vunpack.c.h.b16 %v1186
    %v1299 = vunpack.c.l.b16 %v1187
    %v1300 = vunpack.c.h.b16 %v1187
    %v1301 = vunpack.c.l.b16 %v1188
    %v1302 = vunpack.c.h.b16 %v1188
    %v1303 = vunpack.c.l.b16 %v1189
    %v1304 = vunpack.c.h.b16 %v1189
    %v1305 = vunpack.c.l.b16 %v1190
    %v1306 = vunpack.c.h.b16 %v1190
    %v1307 = vunpack.c.l.b16 %v1191
    %v1308 = vunpack.c.h.b16 %v1191
    %v1309 = vunpack.c.l.b16 %v1192
    %v1310 = vunpack.c.h.b16 %v1192
    %v1311 = vunpack.c.l.b16 %v1193
    %v1312 = vunpack.c.h.b16 %v1193
    %v1313 = vunpack.c.l.b16 %v1194
    %v1314 = vunpack.c.h.b16 %v1194
    %v1315 = vpack.c.b16 %v1253, %v1251
    %v1316 = vpack.c.b16 %v1254, %v1252
    %v1317 = vpack.c.b16 %v1257, %v1255
    %v1318 = vpack.c.b16 %v1258, %v1256
    %v1319 = vpack.c.b16 %v1261, %v1259
    %v1320 = vpack.c.b16 %v1262, %v1260
    %v1321 = vpack.c.b16 %v1265, %v1263
    %v1322 = vpack.c.b16 %v1266, %v1264
    %v1323 = vpack.c.b16 %v1269, %v1267
    %v1324 = vpack.c.b16 %v1270, %v1268
    %v1325 = vpack.c.b16 %v1273, %v1271
    %v1326 = vpack.c.b16 %v1274, %v1272
    %v1327 = vpack.c.b16 %v1277, %v1275
    %v1328 = vpack.c.b16 %v1278, %v1276
    %v1329 = vpack.c.b16 %v1281, %v1279
    %v1330 = vpack.c.b16 %v1282, %v1280
    %v1331 = vpack.c.b16 %v1285, %v1283
    %v1332 = vpack.c.b16 %v1286, %v1284
    %v1333 = vpack.c.b16 %v1289, %v1287
    %v1334 = vpack.c.b16 %v1290, %v1288
    %v1335 = vpack.c.b16 %v1293, %v1291
    %v1336 = vpack.c.b16 %v1294, %v1292
    %v1337 = vpack.c.b16 %v1297, %v1295
    %v1338 = vpack.c.b16 %v1298, %v1296
    %v1339 = vpack.c.b16 %v1301, %v1299
    %v1340 = vpack.c.b16 %v1302, %v1300
    %v1341 = vpack.c.b16 %v1305, %v1303
    %v1342 = vpack.c.b16 %v1306, %v1304
    %v1343 = vpack.c.b16 %v1309, %v1307
    %v1344 = vpack.c.b16 %v1310, %v1308
    %v1345 = vpack.c.b16 %v1313, %v1311
    %v1346 = vpack.c.b16 %v1314, %v1312
    %1379 = vmatprep.subr.bf16.mxu0 %v1316
    %1380 = vmatpush1.bf16.msra.mxu0 %v1315
    %1381 = vmatprep.subr.bf16.mxu0 %v1318
    %1382 = vmatpush1.bf16.msra.mxu0 %v1317
    %1383 = vmatprep.subr.bf16.mxu0 %v1320
    %1384 = vmatpush1.bf16.msra.mxu0 %v1319
    %1385 = vmatprep.subr.bf16.mxu0 %v1322
    %1386 = vmatpush1.bf16.msra.mxu0 %v1321
    %1387 = vmatprep.subr.bf16.mxu0 %v1324
    %1388 = vmatpush1.bf16.msra.mxu0 %v1323
    %1389 = vmatprep.subr.bf16.mxu0 %v1326
    %1390 = vmatpush1.bf16.msra.mxu0 %v1325
    %1391 = vmatprep.subr.bf16.mxu0 %v1328
    %1392 = vmatpush1.bf16.msra.mxu0 %v1327
    %1393 = vmatprep.subr.bf16.mxu0 %v1330
    %1394 = vmatpush1.bf16.msra.mxu0 %v1329
    %1395 = vmatprep.subr.bf16.mxu0 %v1332
    %1396 = vmatpush1.bf16.msra.mxu0 %v1331
    %1397 = vmatprep.subr.bf16.mxu0 %v1334
    %1398 = vmatpush1.bf16.msra.mxu0 %v1333
    %1399 = vmatprep.subr.bf16.mxu0 %v1336
    %1400 = vmatpush1.bf16.msra.mxu0 %v1335
    %1401 = vmatprep.subr.bf16.mxu0 %v1338
    %1402 = vmatpush1.bf16.msra.mxu0 %v1337
    %1403 = vmatprep.subr.bf16.mxu0 %v1340
    %1404 = vmatpush1.bf16.msra.mxu0 %v1339
    %1405 = vmatprep.subr.bf16.mxu0 %v1342
    %1406 = vmatpush1.bf16.msra.mxu0 %v1341
    %1407 = vmatprep.subr.bf16.mxu0 %v1344
    %1408 = vmatpush1.bf16.msra.mxu0 %v1343
    %1409 = vmatprep.subr.bf16.mxu0 %v1346
    %1410 = vmatpush1.bf16.msra.mxu0 %v1345
    %1411 = vmatprep.mubr.bf16.mxu0 %v1216
    %1412 = vmatmul.mubr.bf16.gmra.mrb[0].mxu0 %v1209
    %v1413 = vpop.f32.mrb[0].mxu0
    %v1414 = vadd.f32 0.0, %v1413
    %v1415 = vpop.f32.mrb[0].mxu0
    %v1416 = vadd.f32 0.0, %v1415
    %v1417 = vpop.f32.mrb[0].mxu0
    %v1418 = vpop.f32.mrb[0].mxu0
    %1419 = vdwg.mxu0
    %v1420 = vpack.c.b16 %v1197, %v1197
    %v1421 = vpack.c.b16 %v1198, %v1198
    %v1456 = vunpack.c.l.b16 %v1130
    %v1457 = vunpack.c.h.b16 %v1130
    %v1458 = vunpack.c.l.b16 %v1131
    %v1459 = vunpack.c.h.b16 %v1131
    %v1460 = vunpack.c.l.b16 %v1132
    %v1461 = vunpack.c.h.b16 %v1132
    %v1462 = vunpack.c.l.b16 %v1133
    %v1463 = vunpack.c.h.b16 %v1133
    %v1464 = vunpack.c.l.b16 %v1134
    %v1465 = vunpack.c.h.b16 %v1134
    %v1466 = vunpack.c.l.b16 %v1135
    %v1467 = vunpack.c.h.b16 %v1135
    %v1468 = vunpack.c.l.b16 %v1136
    %v1469 = vunpack.c.h.b16 %v1136
    %v1470 = vunpack.c.l.b16 %v1137
    %v1471 = vunpack.c.h.b16 %v1137
    %v1472 = vunpack.c.l.b16 %v1138
    %v1473 = vunpack.c.h.b16 %v1138
    %v1474 = vunpack.c.l.b16 %v1139
    %v1475 = vunpack.c.h.b16 %v1139
    %v1476 = vunpack.c.l.b16 %v1140
    %v1477 = vunpack.c.h.b16 %v1140
    %v1478 = vunpack.c.l.b16 %v1141
    %v1479 = vunpack.c.h.b16 %v1141
    %v1480 = vunpack.c.l.b16 %v1142
    %v1481 = vunpack.c.h.b16 %v1142
    %v1482 = vunpack.c.l.b16 %v1143
    %v1483 = vunpack.c.h.b16 %v1143
    %v1484 = vunpack.c.l.b16 %v1144
    %v1485 = vunpack.c.h.b16 %v1144
    %v1486 = vunpack.c.l.b16 %v1145
    %v1487 = vunpack.c.h.b16 %v1145
    %v1488 = vunpack.c.l.b16 %v1146
    %v1489 = vunpack.c.h.b16 %v1146
    %v1490 = vunpack.c.l.b16 %v1147
    %v1491 = vunpack.c.h.b16 %v1147
    %v1492 = vunpack.c.l.b16 %v1148
    %v1493 = vunpack.c.h.b16 %v1148
    %v1494 = vunpack.c.l.b16 %v1149
    %v1495 = vunpack.c.h.b16 %v1149
    %v1496 = vunpack.c.l.b16 %v1150
    %v1497 = vunpack.c.h.b16 %v1150
    %v1498 = vunpack.c.l.b16 %v1151
    %v1499 = vunpack.c.h.b16 %v1151
    %v1500 = vunpack.c.l.b16 %v1152
    %v1501 = vunpack.c.h.b16 %v1152
    %v1502 = vunpack.c.l.b16 %v1153
    %v1503 = vunpack.c.h.b16 %v1153
    %v1504 = vunpack.c.l.b16 %v1154
    %v1505 = vunpack.c.h.b16 %v1154
    %v1506 = vunpack.c.l.b16 %v1155
    %v1507 = vunpack.c.h.b16 %v1155
    %v1508 = vunpack.c.l.b16 %v1156
    %v1509 = vunpack.c.h.b16 %v1156
    %v1510 = vunpack.c.l.b16 %v1157
    %v1511 = vunpack.c.h.b16 %v1157
    %v1512 = vunpack.c.l.b16 %v1158
    %v1513 = vunpack.c.h.b16 %v1158
    %v1514 = vunpack.c.l.b16 %v1159
    %v1515 = vunpack.c.h.b16 %v1159
    %v1516 = vunpack.c.l.b16 %v1160
    %v1517 = vunpack.c.h.b16 %v1160
    %v1518 = vunpack.c.l.b16 %v1161
    %v1519 = vunpack.c.h.b16 %v1161
    %v1520 = vpack.c.b16 %v1458, %v1456
    %v1521 = vpack.c.b16 %v1459, %v1457
    %v1522 = vpack.c.b16 %v1462, %v1460
    %v1523 = vpack.c.b16 %v1463, %v1461
    %v1524 = vpack.c.b16 %v1466, %v1464
    %v1525 = vpack.c.b16 %v1467, %v1465
    %v1526 = vpack.c.b16 %v1470, %v1468
    %v1527 = vpack.c.b16 %v1471, %v1469
    %v1528 = vpack.c.b16 %v1474, %v1472
    %v1529 = vpack.c.b16 %v1475, %v1473
    %v1530 = vpack.c.b16 %v1478, %v1476
    %v1531 = vpack.c.b16 %v1479, %v1477
    %v1532 = vpack.c.b16 %v1482, %v1480
    %v1533 = vpack.c.b16 %v1483, %v1481
    %v1534 = vpack.c.b16 %v1486, %v1484
    %v1535 = vpack.c.b16 %v1487, %v1485
    %v1536 = vpack.c.b16 %v1490, %v1488
    %v1537 = vpack.c.b16 %v1491, %v1489
    %v1538 = vpack.c.b16 %v1494, %v1492
    %v1539 = vpack.c.b16 %v1495, %v1493
    %v1540 = vpack.c.b16 %v1498, %v1496
    %v1541 = vpack.c.b16 %v1499, %v1497
    %v1542 = vpack.c.b16 %v1502, %v1500
    %v1543 = vpack.c.b16 %v1503, %v1501
    %v1544 = vpack.c.b16 %v1506, %v1504
    %v1545 = vpack.c.b16 %v1507, %v1505
    %v1546 = vpack.c.b16 %v1510, %v1508
    %v1547 = vpack.c.b16 %v1511, %v1509
    %v1548 = vpack.c.b16 %v1514, %v1512
    %v1549 = vpack.c.b16 %v1515, %v1513
    %v1550 = vpack.c.b16 %v1518, %v1516
    %v1551 = vpack.c.b16 %v1519, %v1517
    %1584 = vmatprep.subr.bf16.mxu0 %v1521
    %1585 = vmatpush1.bf16.msra.mxu0 %v1520
    %1586 = vmatprep.subr.bf16.mxu0 %v1523
    %1587 = vmatpush1.bf16.msra.mxu0 %v1522
    %1588 = vmatprep.subr.bf16.mxu0 %v1525
    %1589 = vmatpush1.bf16.msra.mxu0 %v1524
    %1590 = vmatprep.subr.bf16.mxu0 %v1527
    %1591 = vmatpush1.bf16.msra.mxu0 %v1526
    %1592 = vmatprep.subr.bf16.mxu0 %v1529
    %1593 = vmatpush1.bf16.msra.mxu0 %v1528
    %1594 = vmatprep.subr.bf16.mxu0 %v1531
    %1595 = vmatpush1.bf16.msra.mxu0 %v1530
    %1596 = vmatprep.subr.bf16.mxu0 %v1533
    %1597 = vmatpush1.bf16.msra.mxu0 %v1532
    %1598 = vmatprep.subr.bf16.mxu0 %v1535
    %1599 = vmatpush1.bf16.msra.mxu0 %v1534
    %1600 = vmatprep.subr.bf16.mxu0 %v1537
    %1601 = vmatpush1.bf16.msra.mxu0 %v1536
    %1602 = vmatprep.subr.bf16.mxu0 %v1539
    %1603 = vmatpush1.bf16.msra.mxu0 %v1538
    %1604 = vmatprep.subr.bf16.mxu0 %v1541
    %1605 = vmatpush1.bf16.msra.mxu0 %v1540
    %1606 = vmatprep.subr.bf16.mxu0 %v1543
    %1607 = vmatpush1.bf16.msra.mxu0 %v1542
    %1608 = vmatprep.subr.bf16.mxu0 %v1545
    %1609 = vmatpush1.bf16.msra.mxu0 %v1544
    %1610 = vmatprep.subr.bf16.mxu0 %v1547
    %1611 = vmatpush1.bf16.msra.mxu0 %v1546
    %1612 = vmatprep.subr.bf16.mxu0 %v1549
    %1613 = vmatpush1.bf16.msra.mxu0 %v1548
    %1614 = vmatprep.subr.bf16.mxu0 %v1551
    %1615 = vmatpush1.bf16.msra.mxu0 %v1550
    %1616 = vmatprep.mubr.bf16.mxu0 %v1421
    %1617 = vmatmul.mubr.bf16.gmra.mrb[0].mxu0 %v1420
    %v1618 = vpop.f32.mrb[0].mxu0
    %v1619 = vadd.f32 %v1414, %v1618
    %v1620 = vpop.f32.mrb[0].mxu0
    %v1621 = vadd.f32 %v1416, %v1620
    %v1622 = vpop.f32.mrb[0].mxu0
    %v1623 = vpop.f32.mrb[0].mxu0
    %1624 = vdwg.mxu0
    %s1625 = scalar_lea.vmem [#allocation8], 512
    %v1626 = vld [vmem:[%s1625] sm:$0xff]
    %v1627 = vld [vmem:[%s1625 + $0x8] sm:$0xff]
    %v1628 = vld [vmem:[%s1625 + $0x10] sm:$0xff]
    %v1629 = vld [vmem:[%s1625 + $0x18] sm:$0xff]
    %v1630 = vld [vmem:[%s1625 + $0x20] sm:$0xff]
    %v1631 = vld [vmem:[%s1625 + $0x28] sm:$0xff]
    %v1632 = vld [vmem:[%s1625 + $0x30] sm:$0xff]
    %v1633 = vld [vmem:[%s1625 + $0x38] sm:$0xff]
    %v1634 = vld [vmem:[%s1625 + $0x40] sm:$0xff]
    %v1635 = vld [vmem:[%s1625 + $0x48] sm:$0xff]
    %v1636 = vld [vmem:[%s1625 + $0x50] sm:$0xff]
    %v1637 = vld [vmem:[%s1625 + $0x58] sm:$0xff]
    %v1638 = vld [vmem:[%s1625 + $0x60] sm:$0xff]
    %v1639 = vld [vmem:[%s1625 + $0x68] sm:$0xff]
    %v1640 = vld [vmem:[%s1625 + $0x70] sm:$0xff]
    %v1641 = vld [vmem:[%s1625 + $0x78] sm:$0xff]
    %v1642 = vld [vmem:[%s1625 + $0x80] sm:$0xff]
    %v1643 = vld [vmem:[%s1625 + $0x88] sm:$0xff]
    %v1644 = vld [vmem:[%s1625 + $0x90] sm:$0xff]
    %v1645 = vld [vmem:[%s1625 + $0x98] sm:$0xff]
    %v1646 = vld [vmem:[%s1625 + $0xa0] sm:$0xff]
    %v1647 = vld [vmem:[%s1625 + $0xa8] sm:$0xff]
    %v1648 = vld [vmem:[%s1625 + $0xb0] sm:$0xff]
    %v1649 = vld [vmem:[%s1625 + $0xb8] sm:$0xff]
    %v1650 = vld [vmem:[%s1625 + $0xc0] sm:$0xff]
    %v1651 = vld [vmem:[%s1625 + $0xc8] sm:$0xff]
    %v1652 = vld [vmem:[%s1625 + $0xd0] sm:$0xff]
    %v1653 = vld [vmem:[%s1625 + $0xd8] sm:$0xff]
    %v1654 = vld [vmem:[%s1625 + $0xe0] sm:$0xff]
    %v1655 = vld [vmem:[%s1625 + $0xe8] sm:$0xff]
    %v1656 = vld [vmem:[%s1625 + $0xf0] sm:$0xff]
    %v1657 = vld [vmem:[%s1625 + $0xf8] sm:$0xff]
    %v1659 = vunpack.c.l.b16 %v1129
    %v1660 = vunpack.c.h.b16 %v1129
    %v1661 = vpack.c.b16 %v1199, %v1659
    %v1662 = vpack.c.b16 %v1200, %v1660
    %v1663 = vrot.slane %v1661, 1
    %v1664 = vrot.slane %v1662, 1
    %v1699 = vunpack.c.l.b16 %v1626
    %v1700 = vunpack.c.h.b16 %v1626
    %v1701 = vunpack.c.l.b16 %v1627
    %v1702 = vunpack.c.h.b16 %v1627
    %v1703 = vunpack.c.l.b16 %v1628
    %v1704 = vunpack.c.h.b16 %v1628
    %v1705 = vunpack.c.l.b16 %v1629
    %v1706 = vunpack.c.h.b16 %v1629
    %v1707 = vunpack.c.l.b16 %v1630
    %v1708 = vunpack.c.h.b16 %v1630
    %v1709 = vunpack.c.l.b16 %v1631
    %v1710 = vunpack.c.h.b16 %v1631
    %v1711 = vunpack.c.l.b16 %v1632
    %v1712 = vunpack.c.h.b16 %v1632
    %v1713 = vunpack.c.l.b16 %v1633
    %v1714 = vunpack.c.h.b16 %v1633
    %v1715 = vunpack.c.l.b16 %v1634
    %v1716 = vunpack.c.h.b16 %v1634
    %v1717 = vunpack.c.l.b16 %v1635
    %v1718 = vunpack.c.h.b16 %v1635
    %v1719 = vunpack.c.l.b16 %v1636
    %v1720 = vunpack.c.h.b16 %v1636
    %v1721 = vunpack.c.l.b16 %v1637
    %v1722 = vunpack.c.h.b16 %v1637
    %v1723 = vunpack.c.l.b16 %v1638
    %v1724 = vunpack.c.h.b16 %v1638
    %v1725 = vunpack.c.l.b16 %v1639
    %v1726 = vunpack.c.h.b16 %v1639
    %v1727 = vunpack.c.l.b16 %v1640
    %v1728 = vunpack.c.h.b16 %v1640
    %v1729 = vunpack.c.l.b16 %v1641
    %v1730 = vunpack.c.h.b16 %v1641
    %v1731 = vunpack.c.l.b16 %v1642
    %v1732 = vunpack.c.h.b16 %v1642
    %v1733 = vunpack.c.l.b16 %v1643
    %v1734 = vunpack.c.h.b16 %v1643
    %v1735 = vunpack.c.l.b16 %v1644
    %v1736 = vunpack.c.h.b16 %v1644
    %v1737 = vunpack.c.l.b16 %v1645
    %v1738 = vunpack.c.h.b16 %v1645
    %v1739 = vunpack.c.l.b16 %v1646
    %v1740 = vunpack.c.h.b16 %v1646
    %v1741 = vunpack.c.l.b16 %v1647
    %v1742 = vunpack.c.h.b16 %v1647
    %v1743 = vunpack.c.l.b16 %v1648
    %v1744 = vunpack.c.h.b16 %v1648
    %v1745 = vunpack.c.l.b16 %v1649
    %v1746 = vunpack.c.h.b16 %v1649
    %v1747 = vunpack.c.l.b16 %v1650
    %v1748 = vunpack.c.h.b16 %v1650
    %v1749 = vunpack.c.l.b16 %v1651
    %v1750 = vunpack.c.h.b16 %v1651
    %v1751 = vunpack.c.l.b16 %v1652
    %v1752 = vunpack.c.h.b16 %v1652
    %v1753 = vunpack.c.l.b16 %v1653
    %v1754 = vunpack.c.h.b16 %v1653
    %v1755 = vunpack.c.l.b16 %v1654
    %v1756 = vunpack.c.h.b16 %v1654
    %v1757 = vunpack.c.l.b16 %v1655
    %v1758 = vunpack.c.h.b16 %v1655
    %v1759 = vunpack.c.l.b16 %v1656
    %v1760 = vunpack.c.h.b16 %v1656
    %v1761 = vunpack.c.l.b16 %v1657
    %v1762 = vunpack.c.h.b16 %v1657
    %v1763 = vpack.c.b16 %v1701, %v1699
    %v1764 = vpack.c.b16 %v1702, %v1700
    %v1765 = vpack.c.b16 %v1705, %v1703
    %v1766 = vpack.c.b16 %v1706, %v1704
    %v1767 = vpack.c.b16 %v1709, %v1707
    %v1768 = vpack.c.b16 %v1710, %v1708
    %v1769 = vpack.c.b16 %v1713, %v1711
    %v1770 = vpack.c.b16 %v1714, %v1712
    %v1771 = vpack.c.b16 %v1717, %v1715
    %v1772 = vpack.c.b16 %v1718, %v1716
    %v1773 = vpack.c.b16 %v1721, %v1719
    %v1774 = vpack.c.b16 %v1722, %v1720
    %v1775 = vpack.c.b16 %v1725, %v1723
    %v1776 = vpack.c.b16 %v1726, %v1724
    %v1777 = vpack.c.b16 %v1729, %v1727
    %v1778 = vpack.c.b16 %v1730, %v1728
    %v1779 = vpack.c.b16 %v1733, %v1731
    %v1780 = vpack.c.b16 %v1734, %v1732
    %v1781 = vpack.c.b16 %v1737, %v1735
    %v1782 = vpack.c.b16 %v1738, %v1736
    %v1783 = vpack.c.b16 %v1741, %v1739
    %v1784 = vpack.c.b16 %v1742, %v1740
    %v1785 = vpack.c.b16 %v1745, %v1743
    %v1786 = vpack.c.b16 %v1746, %v1744
    %v1787 = vpack.c.b16 %v1749, %v1747
    %v1788 = vpack.c.b16 %v1750, %v1748
    %v1789 = vpack.c.b16 %v1753, %v1751
    %v1790 = vpack.c.b16 %v1754, %v1752
    %v1791 = vpack.c.b16 %v1757, %v1755
    %v1792 = vpack.c.b16 %v1758, %v1756
    %v1793 = vpack.c.b16 %v1761, %v1759
    %v1794 = vpack.c.b16 %v1762, %v1760
    %1827 = vmatprep.subr.bf16.mxu0 %v1764
    %1828 = vmatpush1.bf16.msra.mxu0 %v1763
    %1829 = vmatprep.subr.bf16.mxu0 %v1766
    %1830 = vmatpush1.bf16.msra.mxu0 %v1765
    %1831 = vmatprep.subr.bf16.mxu0 %v1768
    %1832 = vmatpush1.bf16.msra.mxu0 %v1767
    %1833 = vmatprep.subr.bf16.mxu0 %v1770
    %1834 = vmatpush1.bf16.msra.mxu0 %v1769
    %1835 = vmatprep.subr.bf16.mxu0 %v1772
    %1836 = vmatpush1.bf16.msra.mxu0 %v1771
    %1837 = vmatprep.subr.bf16.mxu0 %v1774
    %1838 = vmatpush1.bf16.msra.mxu0 %v1773
    %1839 = vmatprep.subr.bf16.mxu0 %v1776
    %1840 = vmatpush1.bf16.msra.mxu0 %v1775
    %1841 = vmatprep.subr.bf16.mxu0 %v1778
    %1842 = vmatpush1.bf16.msra.mxu0 %v1777
    %1843 = vmatprep.subr.bf16.mxu0 %v1780
    %1844 = vmatpush1.bf16.msra.mxu0 %v1779
    %1845 = vmatprep.subr.bf16.mxu0 %v1782
    %1846 = vmatpush1.bf16.msra.mxu0 %v1781
    %1847 = vmatprep.subr.bf16.mxu0 %v1784
    %1848 = vmatpush1.bf16.msra.mxu0 %v1783
    %1849 = vmatprep.subr.bf16.mxu0 %v1786
    %1850 = vmatpush1.bf16.msra.mxu0 %v1785
    %1851 = vmatprep.subr.bf16.mxu0 %v1788
    %1852 = vmatpush1.bf16.msra.mxu0 %v1787
    %1853 = vmatprep.subr.bf16.mxu0 %v1790
    %1854 = vmatpush1.bf16.msra.mxu0 %v1789
    %1855 = vmatprep.subr.bf16.mxu0 %v1792
    %1856 = vmatpush1.bf16.msra.mxu0 %v1791
    %1857 = vmatprep.subr.bf16.mxu0 %v1794
    %1858 = vmatpush1.bf16.msra.mxu0 %v1793
    %1859 = vmatprep.mubr.bf16.mxu0 %v1664
    %1860 = vmatmul.mubr.bf16.gmra.mrb[0].mxu0 %v1663
    %v1861 = vpop.f32.mrb[0].mxu0
    %v1862 = vadd.f32 0.0, %v1861
    %v1863 = vpop.f32.mrb[0].mxu0
    %v1864 = vadd.f32 0.0, %v1863
    %v1865 = vpop.f32.mrb[0].mxu0
    %v1866 = vpop.f32.mrb[0].mxu0
    %1867 = vdwg.mxu0
    %v1868 = vadd.f32 %v1619, %v1862
    %v1869 = vadd.f32 %v1621, %v1864
    %v1870 = vld [vmem:[%s140] sm:$0xff]
    %v1871 = vld [vmem:[%s140 + $0x8] sm:$0x11]
    %v1872 = vld [vmem:[%s140] sm:$0xee]
    %v1875 = vunpack.c.l.b16 %v1870
    %v1876 = vunpack.c.h.b16 %v1870
    %v1877 = vunpack.c.l.b16 %v1871
    %v1878 = vunpack.c.h.b16 %v1871
    %v1879 = vpack.c.b16 %v1877, %v1875
    %v1880 = vpack.c.b16 %v1878, %v1876
    %v1882 = vshrl.u32 %v1879, 16
    %v1884 = vshll.u32 %v1879, 16
    %v1886 = vrot.slane %v1884, 1
    %v1887 = vor.u32 %v1882, %v1886
    %v1889 = vshrl.u32 %v1880, 16
    %v1891 = vshll.u32 %v1880, 16
    %v1893 = vrot.slane %v1891, 1
    %v1894 = vor.u32 %v1889, %v1893
    %1897 = vmatprep.subr.bf16.mxu0 %v1316
    %1898 = vmatpush1.bf16.msra.mxu0 %v1315
    %1899 = vmatprep.subr.bf16.mxu0 %v1318
    %1900 = vmatpush1.bf16.msra.mxu0 %v1317
    %1901 = vmatprep.subr.bf16.mxu0 %v1320
    %1902 = vmatpush1.bf16.msra.mxu0 %v1319
    %1903 = vmatprep.subr.bf16.mxu0 %v1322
    %1904 = vmatpush1.bf16.msra.mxu0 %v1321
    %1905 = vmatprep.subr.bf16.mxu0 %v1324
    %1906 = vmatpush1.bf16.msra.mxu0 %v1323
    %1907 = vmatprep.subr.bf16.mxu0 %v1326
    %1908 = vmatpush1.bf16.msra.mxu0 %v1325
    %1909 = vmatprep.subr.bf16.mxu0 %v1328
    %1910 = vmatpush1.bf16.msra.mxu0 %v1327
    %1911 = vmatprep.subr.bf16.mxu0 %v1330
    %1912 = vmatpush1.bf16.msra.mxu0 %v1329
    %1913 = vmatprep.subr.bf16.mxu0 %v1332
    %1914 = vmatpush1.bf16.msra.mxu0 %v1331
    %1915 = vmatprep.subr.bf16.mxu0 %v1334
    %1916 = vmatpush1.bf16.msra.mxu0 %v1333
    %1917 = vmatprep.subr.bf16.mxu0 %v1336
    %1918 = vmatpush1.bf16.msra.mxu0 %v1335
    %1919 = vmatprep.subr.bf16.mxu0 %v1338
    %1920 = vmatpush1.bf16.msra.mxu0 %v1337
    %1921 = vmatprep.subr.bf16.mxu0 %v1340
    %1922 = vmatpush1.bf16.msra.mxu0 %v1339
    %1923 = vmatprep.subr.bf16.mxu0 %v1342
    %1924 = vmatpush1.bf16.msra.mxu0 %v1341
    %1925 = vmatprep.subr.bf16.mxu0 %v1344
    %1926 = vmatpush1.bf16.msra.mxu0 %v1343
    %1927 = vmatprep.subr.bf16.mxu0 %v1346
    %1928 = vmatpush1.bf16.msra.mxu0 %v1345
    %1929 = vmatprep.mubr.bf16.mxu0 %v1894
    %1930 = vmatmul.mubr.bf16.gmra.mrb[0].mxu0 %v1887
    %v1931 = vpop.f32.mrb[0].mxu0
    %v1932 = vadd.f32 0.0, %v1931
    %v1933 = vpop.f32.mrb[0].mxu0
    %v1934 = vadd.f32 0.0, %v1933
    %v1935 = vpop.f32.mrb[0].mxu0
    %v1936 = vpop.f32.mrb[0].mxu0
    %1937 = vdwg.mxu0
    %v1938 = vpack.c.b16 %v1875, %v1875
    %v1939 = vpack.c.b16 %v1876, %v1876
    %1942 = vmatprep.subr.bf16.mxu0 %v1521
    %1943 = vmatpush1.bf16.msra.mxu0 %v1520
    %1944 = vmatprep.subr.bf16.mxu0 %v1523
    %1945 = vmatpush1.bf16.msra.mxu0 %v1522
    %1946 = vmatprep.subr.bf16.mxu0 %v1525
    %1947 = vmatpush1.bf16.msra.mxu0 %v1524
    %1948 = vmatprep.subr.bf16.mxu0 %v1527
    %1949 = vmatpush1.bf16.msra.mxu0 %v1526
    %1950 = vmatprep.subr.bf16.mxu0 %v1529
    %1951 = vmatpush1.bf16.msra.mxu0 %v1528
    %1952 = vmatprep.subr.bf16.mxu0 %v1531
    %1953 = vmatpush1.bf16.msra.mxu0 %v1530
    %1954 = vmatprep.subr.bf16.mxu0 %v1533
    %1955 = vmatpush1.bf16.msra.mxu0 %v1532
    %1956 = vmatprep.subr.bf16.mxu0 %v1535
    %1957 = vmatpush1.bf16.msra.mxu0 %v1534
    %1958 = vmatprep.subr.bf16.mxu0 %v1537
    %1959 = vmatpush1.bf16.msra.mxu0 %v1536
    %1960 = vmatprep.subr.bf16.mxu0 %v1539
    %1961 = vmatpush1.bf16.msra.mxu0 %v1538
    %1962 = vmatprep.subr.bf16.mxu0 %v1541
    %1963 = vmatpush1.bf16.msra.mxu0 %v1540
    %1964 = vmatprep.subr.bf16.mxu0 %v1543
    %1965 = vmatpush1.bf16.msra.mxu0 %v1542
    %1966 = vmatprep.subr.bf16.mxu0 %v1545
    %1967 = vmatpush1.bf16.msra.mxu0 %v1544
    %1968 = vmatprep.subr.bf16.mxu0 %v1547
    %1969 = vmatpush1.bf16.msra.mxu0 %v1546
    %1970 = vmatprep.subr.bf16.mxu0 %v1549
    %1971 = vmatpush1.bf16.msra.mxu0 %v1548
    %1972 = vmatprep.subr.bf16.mxu0 %v1551
    %1973 = vmatpush1.bf16.msra.mxu0 %v1550
    %1974 = vmatprep.mubr.bf16.mxu0 %v1939
    %1975 = vmatmul.mubr.bf16.gmra.mrb[0].mxu0 %v1938
    %v1976 = vpop.f32.mrb[0].mxu0
    %v1977 = vadd.f32 %v1932, %v1976
    %v1978 = vpop.f32.mrb[0].mxu0
    %v1979 = vadd.f32 %v1934, %v1978
    %v1980 = vpop.f32.mrb[0].mxu0
    %v1981 = vpop.f32.mrb[0].mxu0
    %1982 = vdwg.mxu0
    %v1984 = vunpack.c.l.b16 %v1872
    %v1985 = vunpack.c.h.b16 %v1872
    %v1986 = vpack.c.b16 %v1877, %v1984
    %v1987 = vpack.c.b16 %v1878, %v1985
    %v1988 = vrot.slane %v1986, 1
    %v1989 = vrot.slane %v1987, 1
    %1992 = vmatprep.subr.bf16.mxu0 %v1764
    %1993 = vmatpush1.bf16.msra.mxu0 %v1763
    %1994 = vmatprep.subr.bf16.mxu0 %v1766
    %1995 = vmatpush1.bf16.msra.mxu0 %v1765
    %1996 = vmatprep.subr.bf16.mxu0 %v1768
    %1997 = vmatpush1.bf16.msra.mxu0 %v1767
    %1998 = vmatprep.subr.bf16.mxu0 %v1770
    %1999 = vmatpush1.bf16.msra.mxu0 %v1769
    %2000 = vmatprep.subr.bf16.mxu0 %v1772
    %2001 = vmatpush1.bf16.msra.mxu0 %v1771
    %2002 = vmatprep.subr.bf16.mxu0 %v1774
    %2003 = vmatpush1.bf16.msra.mxu0 %v1773
    %2004 = vmatprep.subr.bf16.mxu0 %v1776
    %2005 = vmatpush1.bf16.msra.mxu0 %v1775
    %2006 = vmatprep.subr.bf16.mxu0 %v1778
    %2007 = vmatpush1.bf16.msra.mxu0 %v1777
    %2008 = vmatprep.subr.bf16.mxu0 %v1780
    %2009 = vmatpush1.bf16.msra.mxu0 %v1779
    %2010 = vmatprep.subr.bf16.mxu0 %v1782
    %2011 = vmatpush1.bf16.msra.mxu0 %v1781
    %2012 = vmatprep.subr.bf16.mxu0 %v1784
    %2013 = vmatpush1.bf16.msra.mxu0 %v1783
    %2014 = vmatprep.subr.bf16.mxu0 %v1786
    %2015 = vmatpush1.bf16.msra.mxu0 %v1785
    %2016 = vmatprep.subr.bf16.mxu0 %v1788
    %2017 = vmatpush1.bf16.msra.mxu0 %v1787
    %2018 = vmatprep.subr.bf16.mxu0 %v1790
    %2019 = vmatpush1.bf16.msra.mxu0 %v1789
    %2020 = vmatprep.subr.bf16.mxu0 %v1792
    %2021 = vmatpush1.bf16.msra.mxu0 %v1791
    %2022 = vmatprep.subr.bf16.mxu0 %v1794
    %2023 = vmatpush1.bf16.msra.mxu0 %v1793
    %2024 = vmatprep.mubr.bf16.mxu0 %v1989
    %2025 = vmatmul.mubr.bf16.gmra.mrb[0].mxu0 %v1988
    %v2026 = vpop.f32.mrb[0].mxu0
    %v2027 = vadd.f32 0.0, %v2026
    %v2028 = vpop.f32.mrb[0].mxu0
    %v2029 = vadd.f32 0.0, %v2028
    %v2030 = vpop.f32.mrb[0].mxu0
    %v2031 = vpop.f32.mrb[0].mxu0
    %2032 = vdwg.mxu0
    %v2033 = vadd.f32 %v1977, %v2027
    %v2034 = vadd.f32 %v1979, %v2029
    %v2035 = vlaneseq
    %v2036 = vshrl.u32 %v2035, 7
    %v2037 = vsub.s32 1, %v2036
    %v2038 = vrot.slane %v94, %v2037
    %v2039 = vlaneseq
    %v2040 = vshrl.u32 %v2039, 7
    %v2041 = vsub.s32 3, %v2040
    %v2042 = vrot.slane %v94, %v2041
    %v2045 = vlaneseq
    %v2046 = vshrl.u32 %v2045, 7
    %v2047 = vsub.s32 1, %v2046
    %v2048 = vrot.slane %v2038, %v2047
    %v2049 = vlaneseq
    %v2050 = vshrl.u32 %v2049, 7
    %v2051 = vsub.s32 1, %v2050
    %v2052 = vrot.slane %v2042, %v2051
    %v2053 = vadd.f32 %v1868, %v2048
    %v2054 = vadd.f32 %v1869, %v2052
    %v2055 = vadd.f32 %v2033, %v2048
    %v2056 = vadd.f32 %v2034, %v2052
    %v2057 = vrot.slane %v2053, 4
    %v2058 = vadd.f32 %v2053, %v2057
    %v2059 = vrot.slane %v2058, 2
    %v2060 = vadd.f32 %v2058, %v2059
    %v2061 = vrot.slane %v2060, 1
    %v2062 = vadd.f32 %v2060, %v2061
    %v2063 = vrot.slane %v2054, 4
    %v2064 = vadd.f32 %v2054, %v2063
    %v2065 = vrot.slane %v2064, 2
    %v2066 = vadd.f32 %v2064, %v2065
    %v2067 = vrot.slane %v2066, 1
    %v2068 = vadd.f32 %v2066, %v2067
    %v2069 = vrot.slane %v2055, 4
    %v2070 = vadd.f32 %v2055, %v2069
    %v2071 = vrot.slane %v2070, 2
    %v2072 = vadd.f32 %v2070, %v2071
    %v2073 = vrot.slane %v2072, 1
    %v2074 = vadd.f32 %v2072, %v2073
    %v2075 = vrot.slane %v2056, 4
    %v2076 = vadd.f32 %v2056, %v2075
    %v2077 = vrot.slane %v2076, 2
    %v2078 = vadd.f32 %v2076, %v2077
    %v2079 = vrot.slane %v2078, 1
    %v2080 = vadd.f32 %v2078, %v2079
    %v2081 = vadd.f32 %v2062, %v2068
    %v2082 = vadd.f32 %v2074, %v2080
    %2085 = vrot.lane.b32.xlu0 %v2081, 64
    %v2086 = vpop.permute.xlu0 %2085
    %2087 = vrot.lane.b32.xlu0 %v2082, 64
    %v2088 = vpop.permute.xlu0 %2087
    %v2091 = vadd.f32 %v2081, %v2086
    %v2092 = vadd.f32 %v2082, %v2088
    %2095 = vrot.lane.b32.xlu0 %v2091, 96
    %v2096 = vpop.permute.xlu0 %2095
    %2097 = vrot.lane.b32.xlu0 %v2092, 96
    %v2098 = vpop.permute.xlu0 %2097
    %v2101 = vadd.f32 %v2091, %v2096
    %v2102 = vadd.f32 %v2092, %v2098
    %v2103 = vmul.f32 %v2101, 0.015625
    %v2104 = vmul.f32 %v2102, 0.015625
    %v2105 = vld [vmem:[%s4] sm:$0x3]
    %v2106 = vld [vmem:[%s5] sm:$0x3]
    %v2107 = vlaneseq
    %v2108 = vshrl.u32 %v2107, 7
    %v2109 = vsub.s32 0, %v2108
    %v2110 = vrot.slane %v2105, %v2109
    %v2111 = vmul.f32 %v2103, %v2110
    %v2112 = vmul.f32 %v2104, %v2110
    %v2115 = vrot.slane %v2112, 7
    %vm2116 = vcmask 1041409
    %v2117 = vsel %vm2116, %v2115, %v2111
    %vm2119 = vcmask 254976
    %v2120 = vsel %vm2119, %v2117, 0.0
    %2121 = vadd.xlane.f32.xlu0 %v2120
    %v2122 = vpop.xlane.xlu0 %2121
    %v2123 = vmax.f32 %v2122, 0.0
    %v2124 = vlaneseq
    %v2125 = vshrl.u32 %v2124, 7
    %v2126 = vsub.s32 0, %v2125
    %v2127 = vrot.slane %v2106, %v2126
    %v2128 = vmul.f32 %v2123, %v2127
    %v2129 = vadd.f32 %v2128, 0.0
    %v2130 = vlaneseq
    %v2131 = vshrl.u32 %v2130, 7
    %v2132 = vsub.s32 1, %v2131
    %v2133 = vrot.slane %v2105, %v2132
    %v2134 = vmul.f32 %v2103, %v2133
    %v2135 = vmul.f32 %v2104, %v2133
    %v2138 = vrot.slane %v2135, 7
    %v2139 = vsel %vm2116, %v2138, %v2134
    %v2141 = vsel %vm2119, %v2139, 0.0
    %2142 = vadd.xlane.f32.xlu0 %v2141
    %v2143 = vpop.xlane.xlu0 %2142
    %v2144 = vmax.f32 %v2143, 0.0
    %v2145 = vlaneseq
    %v2146 = vshrl.u32 %v2145, 7
    %v2147 = vsub.s32 1, %v2146
    %v2148 = vrot.slane %v2106, %v2147
    %v2149 = vmul.f32 %v2144, %v2148
    %v2150 = vadd.f32 %v2129, %v2149
    %v2151 = vxor.u32 %v2150, 2147483648
    %v2152 = vmul.f32 %v2151, 1.442695
    %v2153 = vpow.pop %v2152
    %v2154 = vadd.f32 %v2153, 1.0
    %v2155 = vrcp.pop %v2154
    %v2156 = vmul.f32 1.0, %v2155
    %2158 = vrot.lane.b32.xlu0 %v2156, 32
    %v2159 = vpop.permute.xlu0 %2158
    %2161 = vrot.lane.b32.xlu0 %v2156, 64
    %v2162 = vpop.permute.xlu0 %2161
    %2164 = vrot.lane.b32.xlu0 %v2156, 96
    %v2165 = vpop.permute.xlu0 %2164
    %vm2167 = vcmask 261120
    %v2168 = vsel %vm2167, %v2156, %v2159
    %vm2169 = vcmask 523264
    %v2170 = vsel %vm2169, %v2168, %v2162
    %vm2171 = vcmask 785408
    %v2172 = vsel %vm2171, %v2170, %v2165
    %v2174 = vcombine.low %v2172, %v2172
    %v2176 = vunpack.c.l.s4 1966171168
    %v2177 = vunpack.c.0.s8 %v2176
    %v2178 = vlaneseq
    %v2179 = vshrl.u32 %v2178, 7
    %v2180 = vsub.s32 %v2177, %v2179
    %v2181 = vrot.slane %v2174, %v2180
    %v2182 = vcombine.high %v2181, %v2181
    %v2184 = vunpack.c.l.s4 1966171168
    %v2185 = vunpack.c.0.s8 %v2184
    %v2186 = vlaneseq
    %v2187 = vshrl.u32 %v2186, 7
    %v2188 = vsub.s32 %v2185, %v2187
    %v2189 = vrot.slane %v2181, %v2188
    %v2191 = vunpack.c.l.s4 1966171168
    %v2192 = vunpack.c.0.s8 %v2191
    %v2193 = vlaneseq
    %v2194 = vshrl.u32 %v2193, 7
    %v2195 = vsub.s32 %v2192, %v2194
    %v2196 = vrot.slane %v2182, %v2195
    %v2197 = vlaneseq
    %v2198 = vshrl.u32 %v2197, 7
    %v2199 = vsub.s32 0, %v2198
    %v2200 = vrot.slane %v2189, %v2199
    %v2201 = vlaneseq
    %v2202 = vshrl.u32 %v2201, 7
    %v2203 = vsub.s32 1, %v2202
    %v2204 = vrot.slane %v2189, %v2203
    %v2205 = vlaneseq
    %v2206 = vshrl.u32 %v2205, 7
    %v2207 = vsub.s32 0, %v2206
    %v2208 = vrot.slane %v2196, %v2207
    %v2209 = vlaneseq
    %v2210 = vshrl.u32 %v2209, 7
    %v2211 = vsub.s32 1, %v2210
    %v2212 = vrot.slane %v2196, %v2211
    %v2217 = vmul.f32 %v2053, %v2200
    %v2218 = vmul.f32 %v2054, %v2204
    %v2219 = vmul.f32 %v2055, %v2208
    %v2220 = vmul.f32 %v2056, %v2212
    %v2221 = vadd.f32 %v2217, %v90
    %v2222 = vadd.f32 %v2218, %v91
    %v2223 = vadd.f32 %v2219, %v92
    %v2224 = vadd.f32 %v2220, %v93
    %v2225 = vmax.f32 %v2221, 0.0
    %v2226 = vmax.f32 %v2222, 0.0
    %v2227 = vmax.f32 %v2223, 0.0
    %v2228 = vmax.f32 %v2224, 0.0
    %2229 = vst [vmem:[#allocation9] sm:$0xff] %v2225
    %2230 = vst [vmem:[#allocation9 + $0x8] sm:$0xff] %v2226
    %2231 = vst [vmem:[#allocation9 + $0x10] sm:$0xff] %v2227
    %2232 = vst [vmem:[#allocation9 + $0x18] sm:$0xff] %v2228
    // Predicated region
    $region38: #{tpu_custom_call.1} parent=1 // pred_check
      _
    $region39: #{tpu_custom_call.1} parent=1 // pred_check_branch
      %2234 = sbr.rel (0) target = $region41
    $region40: #{tpu_custom_call.1} parent=1 // pred_region
      %s2236 = ssub.s32 512, 512
      %2237 = vsyncadd [#allocation5], %s2236
      %s2238 = sshll.u32 [#allocation9], 4
      %s2239 = int_to_ptr.vmem [resolvable:$true] %s2238
      %2244 = dma.vmem_to_hbm [thread:$0]  %s2239, 512, %s6, [#allocation5], 256, 256, 16
    $region41: #{tpu_custom_call.1} parent=1 // pred_fallthru
      _
    // Predicated region
    $region42: #{tpu_custom_call.1} parent=1 // pred_check
      _
    $region43: #{tpu_custom_call.1} parent=1 // pred_check_branch
      %2246 = sbr.rel (0) target = $region45
    $region44: #{tpu_custom_call.1} parent=1 // pred_region
      %2247 = dma.done [#allocation5], 512
    $region45: #{tpu_custom_call.1} parent=1 // pred_fallthru
      _
    %2248 = vsyncpa [#allocation4], 1
    %2249 = vsyncpa [#allocation7], 1
    %2250 = vsyncpa [#allocation5], 1

</llo_original>
